<compile_context>
chip_gen: v7x
topology: tpu7x:2x2x1
jax: 0.10.0
libtpu: 0.0.40
codegen_flags: <defaults>
</compile_context>

<pallas_src>
import functools

import numpy as np
import jax
import jax.numpy as jnp
from jax import lax
from jax.experimental import pallas as pl
from jax.experimental.pallas import tpu as pltpu


# ----------------------------------------------------------------------------
# In-kernel helpers
# ----------------------------------------------------------------------------
def _shift_h(x, dh):
    """x: (H, B, L). Return y with y[h] = x[h + dh], zero outside [0, H).

    H is the leading (major, untiled) axis, so this is a slice + concat of whole
    vreg slabs with a zero slab for the halo -- no misaligned sublane stores,
    no masks, no scratch.
    """
    if dh == 0:
        return x
    H = x.shape[0]
    pad = jnp.zeros((abs(dh),) + x.shape[1:], x.dtype)
    if dh > 0:
        return jnp.concatenate([x[dh:], pad], axis=0)
    return jnp.concatenate([pad, x[:H + dh]], axis=0)


def _pool_h(y, p):
    """Max-pool the leading (H) axis by p. y: (H, B, L) -> (H//p, B, L)."""
    H, B, L = y.shape
    yr = y.reshape(H // p, p, B, L)          # splits a major dim: free reshape
    m = yr[:, 0]
    for i in range(1, p):
        m = jnp.maximum(m, yr[:, i])         # VPU max across vreg slabs
    return m


def _pool_w_max(y, p, C):
    """Group-max over spatial W inside the packed lane dim (lane = w*C + c).

    Returns the same shape; lanes at w % p == 0 hold the pooled max, other lanes
    hold finite junk that the next block's expanded matrix never reads (zero
    rows), so no lane compaction is needed. Rolls run in the (idle) XLU slot.
    """
    L = y.shape[-1]
    m = y
    for j in range(1, p):
        m = jnp.maximum(m, pltpu.roll(y, shift=(L - j * C) % L, axis=2))
    return m


# ----------------------------------------------------------------------------
# Single fused kernel: 3x (conv + folded BN + ReLU + maxpool) + MLP head.
# B images per grid step; batch in sublanes, (W, C) packed into lanes.
# ----------------------------------------------------------------------------
def _encoder_kernel(x_ref, m0_ref, b0_ref, m1_ref, b1_ref, m2_ref, b2_ref,
                    fw1_ref, fb1_ref, fw2_ref, fb2_ref, o_ref,
                    *, B, H0, W0, C, K, pools):
    C0, C1, C2 = C
    p0, p1, p2 = pools
    P = (K - 1) // 2
    H1, W1 = H0 // p0, W0 // p0
    H2, W2 = H1 // p1, W1 // p1
    f32 = jnp.float32

    # ---- block 0: conv(1->C0) + BN + ReLU, maxpool(p0, p0) ------------------
    # x: (H0, B, W0). One (H0*B, W0) x (W0, W0*C0) dot per vertical tap
    # (horizontal taps / zero-pad in W are inside m0).
    x0 = x_ref[...]
    acc = jnp.dot(_shift_h(x0, -P).reshape(H0 * B, W0), m0_ref[0],
                  preferred_element_type=f32)
    for kh in range(1, K):
        acc = acc + jnp.dot(_shift_h(x0, kh - P).reshape(H0 * B, W0),
                            m0_ref[kh], preferred_element_type=f32)
    y = jnp.maximum(acc + b0_ref[...], 0.0).reshape(H0, B, W0 * C0)
    x1 = _pool_w_max(_pool_h(y, p0), p0, C0)          # (H1, B, W0*C0)

    # ---- block 1: conv(C0->C1) + BN + ReLU, maxpool(p1, p1) -----------------
    L1 = W0 * C0
    xcat = jnp.concatenate([_shift_h(x1, dh) for dh in range(-P, P + 1)], axis=2)
    y = jnp.dot(xcat.reshape(H1 * B, K * L1), m1_ref[...],
                preferred_element_type=f32)            # single im2col matmul
    y = jnp.maximum(y + b1_ref[...], 0.0).reshape(H1, B, W1 * C1)
    x2 = _pool_w_max(_pool_h(y, p1), p1, C1)          # (H2, B, W1*C1)

    # ---- block 2: conv(C1->C2) + BN + ReLU, global maxpool ------------------
    L2 = W1 * C1
    xcat = jnp.concatenate([_shift_h(x2, dh) for dh in range(-P, P + 1)], axis=2)
    y = jnp.dot(xcat.reshape(H2 * B, K * L2), m2_ref[...],
                preferred_element_type=f32)            # single im2col matmul
    y = jnp.maximum(y + b2_ref[...], 0.0).reshape(H2, B, W2 * C2)
    g = y[0]
    for h in range(1, H2):                             # global max over H
        g = jnp.maximum(g, y[h])                       # (B, W2*C2)
    feat = g[:, 0:C2]
    for j in range(1, W2):                             # global max over W
        feat = jnp.maximum(feat, g[:, j * C2:(j + 1) * C2])   # (B, C2)

    # ---- fcpart: Linear -> ReLU -> Linear (stays in VMEM) -------------------
    h1 = jnp.maximum(jnp.dot(feat, fw1_ref[...], preferred_element_type=f32)
                     + fb1_ref[...], 0.0)
    out = jnp.dot(h1, fw2_ref[...], preferred_element_type=f32) + fb2_ref[...]
    o_ref[...] = out.astype(o_ref.dtype)               # (B, Lv4) dense tile


# ----------------------------------------------------------------------------
# Wrapper: builds the lane-packed, BN-folded conv matrices and calls the kernel.
# ----------------------------------------------------------------------------
def _build_conv_matrix(w, scale, shift, *, K, Cin, Cout, W_sp, in_W, in_stride):
    """Banded per-row conv matrix for the packed (W*C in lanes) layout.

    Input-row lanes : lane = (in_stride * w_in) * Cin + ci   (in_W * Cin lanes;
                      rows at w % in_stride != 0 are zero -> W-pool selection folded in)
    Output-row lanes: lane = w_out * Cout + co               (W_sp * Cout lanes)

    Returns M: (K, in_W*Cin, W_sp*Cout)  with  out_row = sum_kh in_row[h+kh-P] @ M[kh],
    and bias: (1, W_sp*Cout).  BN scale / (shift + conv bias) are folded in.
    """
    P = (K - 1) // 2
    R = np.zeros((K, W_sp, W_sp), np.float32)          # [kw, w_in, w_out]
    for kw in range(K):
        for w_out in range(W_sp):
            w_in = w_out + kw - P
            if 0 <= w_in < W_sp:
                R[kw, w_in, w_out] = 1.0
    wk = w.reshape(K, K, Cin, Cout)                     # [kh, kw, ci, co]
    dense = jnp.einsum('kaw,hkio->haiwo', jnp.asarray(R), wk)
    dense = dense.reshape(K, W_sp, Cin, W_sp * Cout)
    M = jnp.zeros((K, in_W, Cin, W_sp * Cout), jnp.float32)
    M = M.at[:, ::in_stride, :, :].set(dense)
    M = M.reshape(K, in_W * Cin, W_sp * Cout)
    col_scale = jnp.tile(scale.reshape(-1), (W_sp,))    # lane w*Cout+co -> scale[co]
    M = M * col_scale[None, None, :]
    bias = jnp.tile(shift.reshape(-1), (W_sp,)).reshape(1, W_sp * Cout)
    return M, bias


def encoder_forward(x_nchw, params, Lv, ks, *, block_batch=8):
    N, Cin, H0, W0 = x_nchw.shape
    assert Cin == 1, "Encoder's first conv has in_channels=1"
    assert ks % 2 == 1, "odd kernel size required ('same' padding)"
    pools = (2, 4, 4)
    p0, p1, p2 = pools
    assert H0 % p0 == 0 and W0 % p0 == 0
    H1, W1 = H0 // p0, W0 // p0
    assert H1 % p1 == 0 and W1 % p1 == 0
    H2, W2 = H1 // p1, W1 // p1
    # fcpart input is Lv[2]*1*1 -> the last MaxPool must reduce spatial dims to 1x1
    assert H2 == p2 and W2 == p2

    C0, C1, C2, C3, C4 = Lv
    B = block_batch
    assert B % 8 == 0, "batch tile must be a whole sublane tile"
    N_pad = ((N + B - 1) // B) * B

    c0, c1, c2, fc = params["conv0"], params["conv1"], params["conv2"], params["fc"]
    m0, b0 = _build_conv_matrix(c0["w"], c0["scale"], c0["shift"], K=ks,
                                Cin=1, Cout=C0, W_sp=W0, in_W=W0, in_stride=1)
    m1, b1 = _build_conv_matrix(c1["w"], c1["scale"], c1["shift"], K=ks,
                                Cin=C0, Cout=C1, W_sp=W1, in_W=W0, in_stride=p0)
    m2, b2 = _build_conv_matrix(c2["w"], c2["scale"], c2["shift"], K=ks,
                                Cin=C1, Cout=C2, W_sp=W2, in_W=W1, in_stride=p1)
    m1 = m1.reshape(ks * W0 * C0, W1 * C1)              # single im2col matrix
    m2 = m2.reshape(ks * W1 * C1, W2 * C2)

    # (N,1,H,W) -> (H, N_pad, W): batch in sublanes, W dense in lanes (done once
    # on the tiny raw input; no singleton-lane block, dense DMA).
    x = x_nchw[:, 0].astype(jnp.float32)
    if N_pad != N:
        x = jnp.concatenate([x, jnp.zeros((N_pad - N, H0, W0), jnp.float32)], 0)
    x = jnp.transpose(x, (1, 0, 2))

    kern = functools.partial(_encoder_kernel, B=B, H0=H0, W0=W0,
                             C=(C0, C1, C2), K=ks, pools=pools)
    rep2 = lambda n: (0, 0)
    rep3 = lambda n: (0, 0, 0)

    out = pl.pallas_call(
        kern,
        grid=(N_pad // B,),
        in_specs=[
            pl.BlockSpec((H0, B, W0), lambda n: (0, n, 0)),
            pl.BlockSpec(m0.shape, rep3),
            pl.BlockSpec(b0.shape, rep2),
            pl.BlockSpec(m1.shape, rep2),
            pl.BlockSpec(b1.shape, rep2),
            pl.BlockSpec(m2.shape, rep2),
            pl.BlockSpec(b2.shape, rep2),
            pl.BlockSpec(fc["w1"].shape, rep2),
            pl.BlockSpec(fc["b1"].shape, rep2),
            pl.BlockSpec(fc["w2"].shape, rep2),
            pl.BlockSpec(fc["b2"].shape, rep2),
        ],
        out_specs=pl.BlockSpec((B, C4), lambda n: (n, 0)),
        out_shape=jax.ShapeDtypeStruct((N_pad, C4), jnp.float32),
        compiler_params=pltpu.CompilerParams(dimension_semantics=("parallel",)),
    )(x, m0, b0, m1, b1, m2, b2, fc["w1"], fc["b1"], fc["w2"], fc["b2"])
    return out[:N]


# ----------------------------------------------------------------------------
# Parameters (deterministic synthetic, same shapes/semantics as the module)
# ----------------------------------------------------------------------------
def _fold_bn(conv_bias, gamma, beta, mean, var, eps=1e-5):
    scale = gamma * lax.rsqrt(var + eps)
    shift = (conv_bias - mean) * scale + beta
    return scale.astype(jnp.float32), shift.astype(jnp.float32)


def init_params(key, Lv, ks):
    params = {}
    cins = [1, Lv[0], Lv[1]]
    couts = [Lv[0], Lv[1], Lv[2]]
    keys = jax.random.split(key, 16)
    ki = 0
    for b, (cin, cout) in enumerate(zip(cins, couts)):
        w = 0.2 * jax.random.normal(keys[ki], (ks * ks, cin, cout), jnp.float32); ki += 1
        cb = 0.1 * jax.random.normal(keys[ki], (cout,), jnp.float32); ki += 1
        gamma = 1.0 + 0.1 * jax.random.normal(keys[ki], (cout,), jnp.float32); ki += 1
        beta = 0.05 * jax.random.normal(keys[ki], (cout,), jnp.float32); ki += 1
        mean = 0.02 * jnp.arange(cout, dtype=jnp.float32)
        var = 0.5 + 0.05 * jnp.arange(cout, dtype=jnp.float32)
        scale, shift = _fold_bn(cb, gamma, beta, mean, var)
        params[f"conv{b}"] = dict(w=w, scale=scale, shift=shift)
    w1 = 0.2 * jax.random.normal(keys[ki], (Lv[2], Lv[3]), jnp.float32); ki += 1
    b1 = 0.1 * jax.random.normal(keys[ki], (1, Lv[3]), jnp.float32); ki += 1
    w2 = 0.2 * jax.random.normal(keys[ki], (Lv[3], Lv[4]), jnp.float32); ki += 1
    b2 = 0.1 * jax.random.normal(keys[ki], (1, Lv[4]), jnp.float32); ki += 1
    params["fc"] = dict(w1=w1, b1=b1, w2=w2, b2=b2)
    return params


# ----------------------------------------------------------------------------
# Pure-JAX (XLA) reference with the same folded-BN math, for validation.
# ----------------------------------------------------------------------------
def _ref_forward(x_nchw, params, Lv, ks):
    P = (ks - 1) // 2
    x = jnp.transpose(x_nchw, (0, 2, 3, 1)).astype(jnp.float32)
    pools = (2, 4, 4)
    for b, pool in enumerate(pools):
        p = params[f"conv{b}"]
        N, H, W, _ = x.shape
        Cout = p["w"].shape[-1]
        xp = jnp.pad(x, ((0, 0), (P, P), (P, P), (0, 0)))
        acc = jnp.zeros((N, H, W, Cout), jnp.float32)
        for kh in range(ks):
            for kw in range(ks):
                patch = xp[:, kh:kh + H, kw:kw + W, :]
                acc = acc + jnp.einsum("nhwi,io->nhwo", patch, p["w"][kh * ks + kw],
                                       precision=lax.Precision.HIGHEST)
        y = jnp.maximum(acc * p["scale"].reshape(1, 1, 1, -1)
                        + p["shift"].reshape(1, 1, 1, -1), 0.0)
        x = y.reshape(N, H // pool, pool, W // pool, pool, Cout).max(axis=(2, 4))
    fc = params["fc"]
    z = x.reshape(x.shape[0], Lv[2])
    h = jnp.maximum(jnp.dot(z, fc["w1"], precision=lax.Precision.HIGHEST) + fc["b1"], 0.0)
    return jnp.dot(h, fc["w2"], precision=lax.Precision.HIGHEST) + fc["b2"]


if __name__ == "__main__":
    Lv = [4, 8, 16, 32, 8]          # Lv[0..4]
    ks = 3                          # odd kernel -> 'same' conv
    N = 2
    key = jax.random.PRNGKey(0)
    k_x, k_p = jax.random.split(key)
    # 32x32 input so pools (2,4,4) reduce the spatial dims to 1x1 (fcpart = Lv[2]*1*1)
    x = jax.random.normal(k_x, (N, 1, 32, 32), dtype=jnp.float32)   # NCHW like PyTorch

    params = init_params(k_p, Lv, ks)
    out = encoder_forward(x, params, Lv, ks)
    out = jax.block_until_ready(out)
    assert out.shape == (N, Lv[4]), out.shape
    assert bool(jnp.all(jnp.isfinite(out)))

    ref = _ref_forward(x, params, Lv, ks)
    assert jnp.allclose(out, ref, atol=5e-2, rtol=5e-2), float(jnp.max(jnp.abs(out - ref)))
    print("KERNEL_OK")
</pallas_src>

<mosaic_0001>
module attributes {stable_mosaic.version = 11 : i64} {
  func.func @_encoder_kernel(%arg0: i32, %arg1: memref<32x8x32xf32, #tpu.memory_space<vmem>>, %arg2: memref<3x32x128xf32, #tpu.memory_space<vmem>>, %arg3: memref<1x128xf32, #tpu.memory_space<vmem>>, %arg4: memref<384x128xf32, #tpu.memory_space<vmem>>, %arg5: memref<1x128xf32, #tpu.memory_space<vmem>>, %arg6: memref<384x64xf32, #tpu.memory_space<vmem>>, %arg7: memref<1x64xf32, #tpu.memory_space<vmem>>, %arg8: memref<16x32xf32, #tpu.memory_space<vmem>>, %arg9: memref<1x32xf32, #tpu.memory_space<vmem>>, %arg10: memref<32x8xf32, #tpu.memory_space<vmem>>, %arg11: memref<1x8xf32, #tpu.memory_space<vmem>>, %arg12: memref<8x8xf32, #tpu.memory_space<vmem>>) attributes {dimension_semantics = [#tpu.dimension_semantics<parallel>], iteration_bounds = array<i64: 1>, scalar_prefetch = 0 : i64, scratch_operands = 0 : i64, tpu.core_type = #tpu.core_type<tc>, window_params = [{transform_indices = @transform_0, window_bounds = array<i64: 32, 8, 32>}, {pipeline_mode = #tpu.pipeline_mode<synchronous>, transform_indices = @transform_1, window_bounds = array<i64: 3, 32, 128>}, {pipeline_mode = #tpu.pipeline_mode<synchronous>, transform_indices = @transform_2, window_bounds = array<i64: 1, 128>}, {pipeline_mode = #tpu.pipeline_mode<synchronous>, transform_indices = @transform_3, window_bounds = array<i64: 384, 128>}, {pipeline_mode = #tpu.pipeline_mode<synchronous>, transform_indices = @transform_4, window_bounds = array<i64: 1, 128>}, {pipeline_mode = #tpu.pipeline_mode<synchronous>, transform_indices = @transform_5, window_bounds = array<i64: 384, 64>}, {pipeline_mode = #tpu.pipeline_mode<synchronous>, transform_indices = @transform_6, window_bounds = array<i64: 1, 64>}, {pipeline_mode = #tpu.pipeline_mode<synchronous>, transform_indices = @transform_7, window_bounds = array<i64: 16, 32>}, {pipeline_mode = #tpu.pipeline_mode<synchronous>, transform_indices = @transform_8, window_bounds = array<i64: 1, 32>}, {pipeline_mode = #tpu.pipeline_mode<synchronous>, transform_indices = @transform_9, window_bounds = array<i64: 32, 8>}, {pipeline_mode = #tpu.pipeline_mode<synchronous>, transform_indices = @transform_10, window_bounds = array<i64: 1, 8>}, {transform_indices = @transform_11, window_bounds = array<i64: 8, 8>}]} {
    %c0 = arith.constant 0 : index
    %c0_0 = arith.constant 0 : index
    %c0_1 = arith.constant 0 : index
    %0 = vector.load %arg1[%c0, %c0_0, %c0_1] : memref<32x8x32xf32, #tpu.memory_space<vmem>>, vector<32x8x32xf32>
    %cst = arith.constant 0.000000e+00 : f32
    %1 = vector.broadcast %cst : f32 to vector<1x8x32xf32>
    %2 = vector.extract_strided_slice %0 {offsets = [0, 0, 0], sizes = [31, 8, 32], strides = [1, 1, 1]} : vector<32x8x32xf32> to vector<31x8x32xf32>
    %3 = tpu.concatenate %1, %2 in 0 : vector<1x8x32xf32>, vector<31x8x32xf32> -> vector<32x8x32xf32>
    %4 = vector.shape_cast %3 : vector<32x8x32xf32> to vector<256x32xf32>
    %c0_2 = arith.constant 0 : index
    %c0_3 = arith.constant 0 : index
    %c0_4 = arith.constant 0 : index
    %5 = vector.load %arg2[%c0_2, %c0_3, %c0_4] : memref<3x32x128xf32, #tpu.memory_space<vmem>>, vector<1x32x128xf32>
    %6 = vector.shape_cast %5 : vector<1x32x128xf32> to vector<32x128xf32>
    %cst_5 = arith.constant dense<0.000000e+00> : vector<256x128xf32>
    %7 = tpu.matmul %4, %6, %cst_5 {dimension_numbers = #tpu.dot_dimension_numbers<[1], [0], [0], [1], [0, 0, 1, 1], [], []>} : vector<256x32xf32>, vector<32x128xf32>, vector<256x128xf32> -> vector<256x128xf32>
    %8 = vector.shape_cast %0 : vector<32x8x32xf32> to vector<256x32xf32>
    %c1 = arith.constant 1 : index
    %c0_6 = arith.constant 0 : index
    %c0_7 = arith.constant 0 : index
    %9 = vector.load %arg2[%c1, %c0_6, %c0_7] : memref<3x32x128xf32, #tpu.memory_space<vmem>>, vector<1x32x128xf32>
    %10 = vector.shape_cast %9 : vector<1x32x128xf32> to vector<32x128xf32>
    %cst_8 = arith.constant dense<0.000000e+00> : vector<256x128xf32>
    %11 = tpu.matmul %8, %10, %cst_8 {dimension_numbers = #tpu.dot_dimension_numbers<[1], [0], [0], [1], [0, 0, 1, 1], [], []>} : vector<256x32xf32>, vector<32x128xf32>, vector<256x128xf32> -> vector<256x128xf32>
    %12 = arith.addf %7, %11 : vector<256x128xf32>
    %cst_9 = arith.constant 0.000000e+00 : f32
    %13 = vector.broadcast %cst_9 : f32 to vector<1x8x32xf32>
    %14 = vector.extract_strided_slice %0 {offsets = [1, 0, 0], sizes = [31, 8, 32], strides = [1, 1, 1]} : vector<32x8x32xf32> to vector<31x8x32xf32>
    %15 = tpu.concatenate %14, %13 in 0 : vector<31x8x32xf32>, vector<1x8x32xf32> -> vector<32x8x32xf32>
    %16 = vector.shape_cast %15 : vector<32x8x32xf32> to vector<256x32xf32>
    %c2 = arith.constant 2 : index
    %c0_10 = arith.constant 0 : index
    %c0_11 = arith.constant 0 : index
    %17 = vector.load %arg2[%c2, %c0_10, %c0_11] : memref<3x32x128xf32, #tpu.memory_space<vmem>>, vector<1x32x128xf32>
    %18 = vector.shape_cast %17 : vector<1x32x128xf32> to vector<32x128xf32>
    %cst_12 = arith.constant dense<0.000000e+00> : vector<256x128xf32>
    %19 = tpu.matmul %16, %18, %cst_12 {dimension_numbers = #tpu.dot_dimension_numbers<[1], [0], [0], [1], [0, 0, 1, 1], [], []>} : vector<256x32xf32>, vector<32x128xf32>, vector<256x128xf32> -> vector<256x128xf32>
    %20 = arith.addf %12, %19 : vector<256x128xf32>
    %c0_13 = arith.constant 0 : index
    %c0_14 = arith.constant 0 : index
    %21 = vector.load %arg3[%c0_13, %c0_14] : memref<1x128xf32, #tpu.memory_space<vmem>>, vector<1x128xf32>
    %22 = vector.broadcast %21 : vector<1x128xf32> to vector<256x128xf32>
    %23 = arith.addf %20, %22 : vector<256x128xf32>
    %cst_15 = arith.constant 0.000000e+00 : f32
    %24 = vector.broadcast %cst_15 : f32 to vector<256x128xf32>
    %25 = arith.maximumf %23, %24 : vector<256x128xf32>
    %26 = vector.shape_cast %25 : vector<256x128xf32> to vector<32x8x128xf32>
    %27 = vector.shape_cast %26 : vector<32x8x128xf32> to vector<16x2x8x128xf32>
    %28 = vector.extract_strided_slice %27 {offsets = [0, 0, 0, 0], sizes = [16, 1, 8, 128], strides = [1, 1, 1, 1]} : vector<16x2x8x128xf32> to vector<16x1x8x128xf32>
    %29 = vector.shape_cast %28 : vector<16x1x8x128xf32> to vector<16x8x128xf32>
    %30 = vector.extract_strided_slice %27 {offsets = [0, 1, 0, 0], sizes = [16, 1, 8, 128], strides = [1, 1, 1, 1]} : vector<16x2x8x128xf32> to vector<16x1x8x128xf32>
    %31 = vector.shape_cast %30 : vector<16x1x8x128xf32> to vector<16x8x128xf32>
    %32 = arith.maximumf %29, %31 : vector<16x8x128xf32>
    %c124_i32 = arith.constant 124 : i32
    %33 = tpu.dynamic_rotate %32 by %c124_i32 dim 2 : vector<16x8x128xf32>, i32 -> vector<16x8x128xf32>
    %34 = arith.maximumf %32, %33 : vector<16x8x128xf32>
    %cst_16 = arith.constant 0.000000e+00 : f32
    %35 = vector.broadcast %cst_16 : f32 to vector<1x8x128xf32>
    %36 = vector.extract_strided_slice %34 {offsets = [0, 0, 0], sizes = [15, 8, 128], strides = [1, 1, 1]} : vector<16x8x128xf32> to vector<15x8x128xf32>
    %37 = tpu.concatenate %35, %36 in 0 : vector<1x8x128xf32>, vector<15x8x128xf32> -> vector<16x8x128xf32>
    %cst_17 = arith.constant 0.000000e+00 : f32
    %38 = vector.broadcast %cst_17 : f32 to vector<1x8x128xf32>
    %39 = vector.extract_strided_slice %34 {offsets = [1, 0, 0], sizes = [15, 8, 128], strides = [1, 1, 1]} : vector<16x8x128xf32> to vector<15x8x128xf32>
    %40 = tpu.concatenate %39, %38 in 0 : vector<15x8x128xf32>, vector<1x8x128xf32> -> vector<16x8x128xf32>
    %41 = tpu.concatenate %37, %34, %40 in 2 : vector<16x8x128xf32>, vector<16x8x128xf32>, vector<16x8x128xf32> -> vector<16x8x384xf32>
    %42 = vector.shape_cast %41 : vector<16x8x384xf32> to vector<128x384xf32>
    %c0_18 = arith.constant 0 : index
    %c0_19 = arith.constant 0 : index
    %43 = vector.load %arg4[%c0_18, %c0_19] : memref<384x128xf32, #tpu.memory_space<vmem>>, vector<384x128xf32>
    %cst_20 = arith.constant dense<0.000000e+00> : vector<128x128xf32>
    %44 = tpu.matmul %42, %43, %cst_20 {dimension_numbers = #tpu.dot_dimension_numbers<[1], [0], [0], [1], [0, 0, 1, 1], [], []>} : vector<128x384xf32>, vector<384x128xf32>, vector<128x128xf32> -> vector<128x128xf32>
    %c0_21 = arith.constant 0 : index
    %c0_22 = arith.constant 0 : index
    %45 = vector.load %arg5[%c0_21, %c0_22] : memref<1x128xf32, #tpu.memory_space<vmem>>, vector<1x128xf32>
    %46 = vector.broadcast %45 : vector<1x128xf32> to vector<128x128xf32>
    %47 = arith.addf %44, %46 : vector<128x128xf32>
    %cst_23 = arith.constant 0.000000e+00 : f32
    %48 = vector.broadcast %cst_23 : f32 to vector<128x128xf32>
    %49 = arith.maximumf %47, %48 : vector<128x128xf32>
    %50 = vector.shape_cast %49 : vector<128x128xf32> to vector<16x8x128xf32>
    %51 = vector.shape_cast %50 : vector<16x8x128xf32> to vector<4x4x8x128xf32>
    %52 = vector.extract_strided_slice %51 {offsets = [0, 0, 0, 0], sizes = [4, 1, 8, 128], strides = [1, 1, 1, 1]} : vector<4x4x8x128xf32> to vector<4x1x8x128xf32>
    %53 = vector.shape_cast %52 : vector<4x1x8x128xf32> to vector<4x8x128xf32>
    %54 = vector.extract_strided_slice %51 {offsets = [0, 1, 0, 0], sizes = [4, 1, 8, 128], strides = [1, 1, 1, 1]} : vector<4x4x8x128xf32> to vector<4x1x8x128xf32>
    %55 = vector.shape_cast %54 : vector<4x1x8x128xf32> to vector<4x8x128xf32>
    %56 = arith.maximumf %53, %55 : vector<4x8x128xf32>
    %57 = vector.extract_strided_slice %51 {offsets = [0, 2, 0, 0], sizes = [4, 1, 8, 128], strides = [1, 1, 1, 1]} : vector<4x4x8x128xf32> to vector<4x1x8x128xf32>
    %58 = vector.shape_cast %57 : vector<4x1x8x128xf32> to vector<4x8x128xf32>
    %59 = arith.maximumf %56, %58 : vector<4x8x128xf32>
    %60 = vector.extract_strided_slice %51 {offsets = [0, 3, 0, 0], sizes = [4, 1, 8, 128], strides = [1, 1, 1, 1]} : vector<4x4x8x128xf32> to vector<4x1x8x128xf32>
    %61 = vector.shape_cast %60 : vector<4x1x8x128xf32> to vector<4x8x128xf32>
    %62 = arith.maximumf %59, %61 : vector<4x8x128xf32>
    %c120_i32 = arith.constant 120 : i32
    %63 = tpu.dynamic_rotate %62 by %c120_i32 dim 2 : vector<4x8x128xf32>, i32 -> vector<4x8x128xf32>
    %64 = arith.maximumf %62, %63 : vector<4x8x128xf32>
    %c112_i32 = arith.constant 112 : i32
    %65 = tpu.dynamic_rotate %62 by %c112_i32 dim 2 : vector<4x8x128xf32>, i32 -> vector<4x8x128xf32>
    %66 = arith.maximumf %64, %65 : vector<4x8x128xf32>
    %c104_i32 = arith.constant 104 : i32
    %67 = tpu.dynamic_rotate %62 by %c104_i32 dim 2 : vector<4x8x128xf32>, i32 -> vector<4x8x128xf32>
    %68 = arith.maximumf %66, %67 : vector<4x8x128xf32>
    %cst_24 = arith.constant 0.000000e+00 : f32
    %69 = vector.broadcast %cst_24 : f32 to vector<1x8x128xf32>
    %70 = vector.extract_strided_slice %68 {offsets = [0, 0, 0], sizes = [3, 8, 128], strides = [1, 1, 1]} : vector<4x8x128xf32> to vector<3x8x128xf32>
    %71 = tpu.concatenate %69, %70 in 0 : vector<1x8x128xf32>, vector<3x8x128xf32> -> vector<4x8x128xf32>
    %cst_25 = arith.constant 0.000000e+00 : f32
    %72 = vector.broadcast %cst_25 : f32 to vector<1x8x128xf32>
    %73 = vector.extract_strided_slice %68 {offsets = [1, 0, 0], sizes = [3, 8, 128], strides = [1, 1, 1]} : vector<4x8x128xf32> to vector<3x8x128xf32>
    %74 = tpu.concatenate %73, %72 in 0 : vector<3x8x128xf32>, vector<1x8x128xf32> -> vector<4x8x128xf32>
    %75 = tpu.concatenate %71, %68, %74 in 2 : vector<4x8x128xf32>, vector<4x8x128xf32>, vector<4x8x128xf32> -> vector<4x8x384xf32>
    %76 = vector.shape_cast %75 : vector<4x8x384xf32> to vector<32x384xf32>
    %c0_26 = arith.constant 0 : index
    %c0_27 = arith.constant 0 : index
    %77 = vector.load %arg6[%c0_26, %c0_27] : memref<384x64xf32, #tpu.memory_space<vmem>>, vector<384x64xf32>
    %cst_28 = arith.constant dense<0.000000e+00> : vector<32x64xf32>
    %78 = tpu.matmul %76, %77, %cst_28 {dimension_numbers = #tpu.dot_dimension_numbers<[1], [0], [0], [1], [0, 0, 1, 1], [], []>} : vector<32x384xf32>, vector<384x64xf32>, vector<32x64xf32> -> vector<32x64xf32>
    %c0_29 = arith.constant 0 : index
    %c0_30 = arith.constant 0 : index
    %79 = vector.load %arg7[%c0_29, %c0_30] : memref<1x64xf32, #tpu.memory_space<vmem>>, vector<1x64xf32>
    %80 = vector.broadcast %79 : vector<1x64xf32> to vector<32x64xf32>
    %81 = arith.addf %78, %80 : vector<32x64xf32>
    %cst_31 = arith.constant 0.000000e+00 : f32
    %82 = vector.broadcast %cst_31 : f32 to vector<32x64xf32>
    %83 = arith.maximumf %81, %82 : vector<32x64xf32>
    %84 = vector.shape_cast %83 : vector<32x64xf32> to vector<4x8x64xf32>
    %85 = vector.extract_strided_slice %84 {offsets = [0, 0, 0], sizes = [1, 8, 64], strides = [1, 1, 1]} : vector<4x8x64xf32> to vector<1x8x64xf32>
    %86 = vector.shape_cast %85 : vector<1x8x64xf32> to vector<8x64xf32>
    %87 = vector.extract_strided_slice %84 {offsets = [1, 0, 0], sizes = [1, 8, 64], strides = [1, 1, 1]} : vector<4x8x64xf32> to vector<1x8x64xf32>
    %88 = vector.shape_cast %87 : vector<1x8x64xf32> to vector<8x64xf32>
    %89 = arith.maximumf %86, %88 : vector<8x64xf32>
    %90 = vector.extract_strided_slice %84 {offsets = [2, 0, 0], sizes = [1, 8, 64], strides = [1, 1, 1]} : vector<4x8x64xf32> to vector<1x8x64xf32>
    %91 = vector.shape_cast %90 : vector<1x8x64xf32> to vector<8x64xf32>
    %92 = arith.maximumf %89, %91 : vector<8x64xf32>
    %93 = vector.extract_strided_slice %84 {offsets = [3, 0, 0], sizes = [1, 8, 64], strides = [1, 1, 1]} : vector<4x8x64xf32> to vector<1x8x64xf32>
    %94 = vector.shape_cast %93 : vector<1x8x64xf32> to vector<8x64xf32>
    %95 = arith.maximumf %92, %94 : vector<8x64xf32>
    %96 = vector.extract_strided_slice %95 {offsets = [0, 0], sizes = [8, 16], strides = [1, 1]} : vector<8x64xf32> to vector<8x16xf32>
    %97 = vector.extract_strided_slice %95 {offsets = [0, 16], sizes = [8, 16], strides = [1, 1]} : vector<8x64xf32> to vector<8x16xf32>
    %98 = arith.maximumf %96, %97 : vector<8x16xf32>
    %99 = vector.extract_strided_slice %95 {offsets = [0, 32], sizes = [8, 16], strides = [1, 1]} : vector<8x64xf32> to vector<8x16xf32>
    %100 = arith.maximumf %98, %99 : vector<8x16xf32>
    %101 = vector.extract_strided_slice %95 {offsets = [0, 48], sizes = [8, 16], strides = [1, 1]} : vector<8x64xf32> to vector<8x16xf32>
    %102 = arith.maximumf %100, %101 : vector<8x16xf32>
    %c0_32 = arith.constant 0 : index
    %c0_33 = arith.constant 0 : index
    %103 = vector.load %arg8[%c0_32, %c0_33] : memref<16x32xf32, #tpu.memory_space<vmem>>, vector<16x32xf32>
    %cst_34 = arith.constant dense<0.000000e+00> : vector<8x32xf32>
    %104 = tpu.matmul %102, %103, %cst_34 {dimension_numbers = #tpu.dot_dimension_numbers<[1], [0], [0], [1], [0, 0, 1, 1], [], []>} : vector<8x16xf32>, vector<16x32xf32>, vector<8x32xf32> -> vector<8x32xf32>
    %c0_35 = arith.constant 0 : index
    %c0_36 = arith.constant 0 : index
    %105 = vector.load %arg9[%c0_35, %c0_36] : memref<1x32xf32, #tpu.memory_space<vmem>>, vector<1x32xf32>
    %106 = vector.broadcast %105 : vector<1x32xf32> to vector<8x32xf32>
    %107 = arith.addf %104, %106 : vector<8x32xf32>
    %cst_37 = arith.constant 0.000000e+00 : f32
    %108 = vector.broadcast %cst_37 : f32 to vector<8x32xf32>
    %109 = arith.maximumf %107, %108 : vector<8x32xf32>
    %c0_38 = arith.constant 0 : index
    %c0_39 = arith.constant 0 : index
    %110 = vector.load %arg10[%c0_38, %c0_39] : memref<32x8xf32, #tpu.memory_space<vmem>>, vector<32x8xf32>
    %cst_40 = arith.constant dense<0.000000e+00> : vector<8x8xf32>
    %111 = tpu.matmul %109, %110, %cst_40 {dimension_numbers = #tpu.dot_dimension_numbers<[1], [0], [0], [1], [0, 0, 1, 1], [], []>} : vector<8x32xf32>, vector<32x8xf32>, vector<8x8xf32> -> vector<8x8xf32>
    %c0_41 = arith.constant 0 : index
    %c0_42 = arith.constant 0 : index
    %112 = vector.load %arg11[%c0_41, %c0_42] : memref<1x8xf32, #tpu.memory_space<vmem>>, vector<1x8xf32>
    %113 = vector.broadcast %112 : vector<1x8xf32> to vector<8x8xf32>
    %114 = arith.addf %111, %113 : vector<8x8xf32>
    %c0_43 = arith.constant 0 : index
    %c0_44 = arith.constant 0 : index
    %115 = vector.load %arg12[%c0_43, %c0_44] : memref<8x8xf32, #tpu.memory_space<vmem>>, vector<8x8xf32>
    tpu.vector_store %arg12[%c0_43, %c0_44], %114 {strides = array<i32>} : memref<8x8xf32, #tpu.memory_space<vmem>>, vector<8x8xf32>,
    return
  }
  func.func @transform_0(%arg0: i32) -> (i32, i32, i32) {
    %c0_i32 = arith.constant 0 : i32
    %c0_i32_0 = arith.constant 0 : i32
    %c0_i32_1 = arith.constant 0 : i32
    return %c0_i32, %arg0, %c0_i32_0 : i32, i32, i32
  }
  func.func @transform_1(%arg0: i32) -> (i32, i32, i32) {
    %c0_i32 = arith.constant 0 : i32
    %c0_i32_0 = arith.constant 0 : i32
    %c0_i32_1 = arith.constant 0 : i32
    %c0_i32_2 = arith.constant 0 : i32
    return %c0_i32, %c0_i32_0, %c0_i32_1 : i32, i32, i32
  }
  func.func @transform_2(%arg0: i32) -> (i32, i32) {
    %c0_i32 = arith.constant 0 : i32
    %c0_i32_0 = arith.constant 0 : i32
    %c0_i32_1 = arith.constant 0 : i32
    return %c0_i32, %c0_i32_0 : i32, i32
  }
  func.func @transform_3(%arg0: i32) -> (i32, i32) {
    %c0_i32 = arith.constant 0 : i32
    %c0_i32_0 = arith.constant 0 : i32
    %c0_i32_1 = arith.constant 0 : i32
    return %c0_i32, %c0_i32_0 : i32, i32
  }
  func.func @transform_4(%arg0: i32) -> (i32, i32) {
    %c0_i32 = arith.constant 0 : i32
    %c0_i32_0 = arith.constant 0 : i32
    %c0_i32_1 = arith.constant 0 : i32
    return %c0_i32, %c0_i32_0 : i32, i32
  }
  func.func @transform_5(%arg0: i32) -> (i32, i32) {
    %c0_i32 = arith.constant 0 : i32
    %c0_i32_0 = arith.constant 0 : i32
    %c0_i32_1 = arith.constant 0 : i32
    return %c0_i32, %c0_i32_0 : i32, i32
  }
  func.func @transform_6(%arg0: i32) -> (i32, i32) {
    %c0_i32 = arith.constant 0 : i32
    %c0_i32_0 = arith.constant 0 : i32
    %c0_i32_1 = arith.constant 0 : i32
    return %c0_i32, %c0_i32_0 : i32, i32
  }
  func.func @transform_7(%arg0: i32) -> (i32, i32) {
    %c0_i32 = arith.constant 0 : i32
    %c0_i32_0 = arith.constant 0 : i32
    %c0_i32_1 = arith.constant 0 : i32
    return %c0_i32, %c0_i32_0 : i32, i32
  }
  func.func @transform_8(%arg0: i32) -> (i32, i32) {
    %c0_i32 = arith.constant 0 : i32
    %c0_i32_0 = arith.constant 0 : i32
    %c0_i32_1 = arith.constant 0 : i32
    return %c0_i32, %c0_i32_0 : i32, i32
  }
  func.func @transform_9(%arg0: i32) -> (i32, i32) {
    %c0_i32 = arith.constant 0 : i32
    %c0_i32_0 = arith.constant 0 : i32
    %c0_i32_1 = arith.constant 0 : i32
    return %c0_i32, %c0_i32_0 : i32, i32
  }
  func.func @transform_10(%arg0: i32) -> (i32, i32) {
    %c0_i32 = arith.constant 0 : i32
    %c0_i32_0 = arith.constant 0 : i32
    %c0_i32_1 = arith.constant 0 : i32
    return %c0_i32, %c0_i32_0 : i32, i32
  }
  func.func @transform_11(%arg0: i32) -> (i32, i32) {
    %c0_i32 = arith.constant 0 : i32
    %c0_i32_0 = arith.constant 0 : i32
    return %arg0, %c0_i32 : i32, i32
  }
}

</mosaic_0001>

<llo_original>
// kernel: tpu_custom_call.1
$region0: #{tpu_custom_call.1}
  #allocation0 [shape = 'u32[]', space=smem, size = 0x4, offset = 0x4, fixed_abs, tag = 'smem constant byte address 0x4 - core index']
  #allocation1 [shape = 'u32[144,128]{1,0:T(1,128)}', space=vmem, size = 0x12000, scoped, tag = 'internal scratch']
  %s0 = inlined_call_operand.hbm [shape: f32[32,8,32], index: 0, kind: input, shape index: {}]
  %s1 = inlined_call_operand.vmem [shape: f32[3,32,128], index: 1, kind: input, shape index: {}]
  %s2 = inlined_call_operand.vmem [shape: f32[1,128], index: 2, kind: input, shape index: {}]
  %s3 = inlined_call_operand.vmem [shape: f32[384,128], index: 3, kind: input, shape index: {}]
  %s4 = inlined_call_operand.vmem [shape: f32[1,128], index: 4, kind: input, shape index: {}]
  %s5 = inlined_call_operand.vmem [shape: f32[384,64], index: 5, kind: input, shape index: {}]
  %s6 = inlined_call_operand.vmem [shape: f32[1,64], index: 6, kind: input, shape index: {}]
  %s7 = inlined_call_operand.vmem [shape: f32[16,32], index: 7, kind: input, shape index: {}]
  %s8 = inlined_call_operand.vmem [shape: f32[1,32], index: 8, kind: input, shape index: {}]
  %s9 = inlined_call_operand.vmem [shape: f32[32,8], index: 9, kind: input, shape index: {}]
  %s10 = inlined_call_operand.vmem [shape: f32[1,8], index: 10, kind: input, shape index: {}]
  %s11 = inlined_call_operand.hbm [shape: f32[8,8], index: 11, kind: output, shape index: {}]
  %s12 = sld [smem:[#allocation0]]
  $region58: #{tpu_custom_call.1} parent=0
    _
  %s14 = ssub.s32 1, %s12
  %s15 = scalar_select 0, %s14, %s12
  $region1: #{tpu_custom_call.1} parent=0
    #allocation2 [shape = 'u8[131072]{0}', space=vmem, size = 0x20000, scoped, tag = 'input window, operand 0, single buffered']
    #allocation3 [shape = 's32[1]{0}', space=sflag, size = 0x4, scoped, tag = 'scoped memory for tpu_custom_call.1']
    #allocation4 [shape = 's32[1]{0}', space=sflag, size = 0x4, scoped, tag = 'scoped memory for tpu_custom_call.1']
    #allocation5 [shape = 'u8[4096]{0}', space=vmem, size = 0x1000, scoped, tag = 'output window, operand 0, single buffered']
    %16 = vsyncpa [#allocation3], 0
    %17 = vsyncpa [#allocation4], 0
    // Predicated region
    $region2: #{tpu_custom_call.1} parent=1 // pred_check
      _
    $region3: #{tpu_custom_call.1} parent=1 // pred_check_branch
      %19 = sbr.rel (0) target = $region5
    $region4: #{tpu_custom_call.1} parent=1 // pred_region
      %s21 = ssub.s32 4096, 4096
      %22 = vsyncadd [#allocation3], %s21
      %s23 = sshll.u32 [#allocation2], 4
      %s24 = int_to_ptr.vmem [resolvable:$true] %s23
      %29 = dma.hbm_to_vmem [thread:$0]  %s0, 4096, %s24, [#allocation3], 128, 128, 8
    $region5: #{tpu_custom_call.1} parent=1 // pred_fallthru
      _
    // Predicated region
    $region6: #{tpu_custom_call.1} parent=1 // pred_check
      _
    $region7: #{tpu_custom_call.1} parent=1 // pred_check_branch
      %31 = sbr.rel (0) target = $region9
    $region8: #{tpu_custom_call.1} parent=1 // pred_region
      _
    $region9: #{tpu_custom_call.1} parent=1 // pred_fallthru
      _
    // Predicated region
    $region10: #{tpu_custom_call.1} parent=1 // pred_check
      _
    $region11: #{tpu_custom_call.1} parent=1 // pred_check_branch
      %33 = sbr.rel (0) target = $region13
    $region12: #{tpu_custom_call.1} parent=1 // pred_region
      _
    $region13: #{tpu_custom_call.1} parent=1 // pred_fallthru
      _
    // Predicated region
    $region14: #{tpu_custom_call.1} parent=1 // pred_check
      _
    $region15: #{tpu_custom_call.1} parent=1 // pred_check_branch
      %35 = sbr.rel (0) target = $region17
    $region16: #{tpu_custom_call.1} parent=1 // pred_region
      _
    $region17: #{tpu_custom_call.1} parent=1 // pred_fallthru
      _
    // Predicated region
    $region18: #{tpu_custom_call.1} parent=1 // pred_check
      _
    $region19: #{tpu_custom_call.1} parent=1 // pred_check_branch
      %37 = sbr.rel (0) target = $region21
    $region20: #{tpu_custom_call.1} parent=1 // pred_region
      _
    $region21: #{tpu_custom_call.1} parent=1 // pred_fallthru
      _
    // Predicated region
    $region22: #{tpu_custom_call.1} parent=1 // pred_check
      _
    $region23: #{tpu_custom_call.1} parent=1 // pred_check_branch
      %39 = sbr.rel (0) target = $region25
    $region24: #{tpu_custom_call.1} parent=1 // pred_region
      _
    $region25: #{tpu_custom_call.1} parent=1 // pred_fallthru
      _
    // Predicated region
    $region26: #{tpu_custom_call.1} parent=1 // pred_check
      _
    $region27: #{tpu_custom_call.1} parent=1 // pred_check_branch
      %41 = sbr.rel (0) target = $region29
    $region28: #{tpu_custom_call.1} parent=1 // pred_region
      _
    $region29: #{tpu_custom_call.1} parent=1 // pred_fallthru
      _
    // Predicated region
    $region30: #{tpu_custom_call.1} parent=1 // pred_check
      _
    $region31: #{tpu_custom_call.1} parent=1 // pred_check_branch
      %43 = sbr.rel (0) target = $region33
    $region32: #{tpu_custom_call.1} parent=1 // pred_region
      _
    $region33: #{tpu_custom_call.1} parent=1 // pred_fallthru
      _
    // Predicated region
    $region34: #{tpu_custom_call.1} parent=1 // pred_check
      _
    $region35: #{tpu_custom_call.1} parent=1 // pred_check_branch
      %45 = sbr.rel (0) target = $region37
    $region36: #{tpu_custom_call.1} parent=1 // pred_region
      _
    $region37: #{tpu_custom_call.1} parent=1 // pred_fallthru
      _
    // Predicated region
    $region38: #{tpu_custom_call.1} parent=1 // pred_check
      _
    $region39: #{tpu_custom_call.1} parent=1 // pred_check_branch
      %47 = sbr.rel (0) target = $region41
    $region40: #{tpu_custom_call.1} parent=1 // pred_region
      _
    $region41: #{tpu_custom_call.1} parent=1 // pred_fallthru
      _
    // Predicated region
    $region42: #{tpu_custom_call.1} parent=1 // pred_check
      _
    $region43: #{tpu_custom_call.1} parent=1 // pred_check_branch
      %49 = sbr.rel (0) target = $region45
    $region44: #{tpu_custom_call.1} parent=1 // pred_region
      _
    $region45: #{tpu_custom_call.1} parent=1 // pred_fallthru
      _
    // Predicated region
    $region46: #{tpu_custom_call.1} parent=1 // pred_check
      _
    $region47: #{tpu_custom_call.1} parent=1 // pred_check_branch
      %51 = sbr.rel (0) target = $region49
    $region48: #{tpu_custom_call.1} parent=1 // pred_region
      %52 = dma.done [#allocation3], 4096
    $region49: #{tpu_custom_call.1} parent=1 // pred_fallthru
      _
    %v53 = vld [vmem:[#allocation2] sm:$0xff]
    %v54 = vld [vmem:[#allocation2 + $0x8] sm:$0xff]
    %v55 = vld [vmem:[#allocation2 + $0x10] sm:$0xff]
    %v56 = vld [vmem:[#allocation2 + $0x18] sm:$0xff]
    %v57 = vld [vmem:[#allocation2 + $0x20] sm:$0xff]
    %v58 = vld [vmem:[#allocation2 + $0x28] sm:$0xff]
    %v59 = vld [vmem:[#allocation2 + $0x30] sm:$0xff]
    %v60 = vld [vmem:[#allocation2 + $0x38] sm:$0xff]
    %v61 = vld [vmem:[#allocation2 + $0x40] sm:$0xff]
    %v62 = vld [vmem:[#allocation2 + $0x48] sm:$0xff]
    %v63 = vld [vmem:[#allocation2 + $0x50] sm:$0xff]
    %v64 = vld [vmem:[#allocation2 + $0x58] sm:$0xff]
    %v65 = vld [vmem:[#allocation2 + $0x60] sm:$0xff]
    %v66 = vld [vmem:[#allocation2 + $0x68] sm:$0xff]
    %v67 = vld [vmem:[#allocation2 + $0x70] sm:$0xff]
    %v68 = vld [vmem:[#allocation2 + $0x78] sm:$0xff]
    %v69 = vld [vmem:[#allocation2 + $0x80] sm:$0xff]
    %v70 = vld [vmem:[#allocation2 + $0x88] sm:$0xff]
    %v71 = vld [vmem:[#allocation2 + $0x90] sm:$0xff]
    %v72 = vld [vmem:[#allocation2 + $0x98] sm:$0xff]
    %v73 = vld [vmem:[#allocation2 + $0xa0] sm:$0xff]
    %v74 = vld [vmem:[#allocation2 + $0xa8] sm:$0xff]
    %v75 = vld [vmem:[#allocation2 + $0xb0] sm:$0xff]
    %v76 = vld [vmem:[#allocation2 + $0xb8] sm:$0xff]
    %v77 = vld [vmem:[#allocation2 + $0xc0] sm:$0xff]
    %v78 = vld [vmem:[#allocation2 + $0xc8] sm:$0xff]
    %v79 = vld [vmem:[#allocation2 + $0xd0] sm:$0xff]
    %v80 = vld [vmem:[#allocation2 + $0xd8] sm:$0xff]
    %v81 = vld [vmem:[#allocation2 + $0xe0] sm:$0xff]
    %v82 = vld [vmem:[#allocation2 + $0xe8] sm:$0xff]
    %v83 = vld [vmem:[#allocation2 + $0xf0] sm:$0xff]
    %v84 = vld [vmem:[#allocation2 + $0xf8] sm:$0xff]
    %v85 = vld [vmem:[%s1] sm:$0xff]
    %v86 = vld [vmem:[%s1 + $0x8] sm:$0xff]
    %v87 = vld [vmem:[%s1 + $0x10] sm:$0xff]
    %v88 = vld [vmem:[%s1 + $0x18] sm:$0xff]
    %s89 = scalar_lea.vmem %s1, 32
    %v90 = vld [vmem:[%s89] sm:$0xff]
    %v91 = vld [vmem:[%s89 + $0x8] sm:$0xff]
    %v92 = vld [vmem:[%s89 + $0x10] sm:$0xff]
    %v93 = vld [vmem:[%s89 + $0x18] sm:$0xff]
    %vm94 = vcmask 261120
    %v96 = vsel %vm94, %v53, 0
    %v99 = vsel %vm94, %v54, 0
    %v102 = vsel %vm94, %v55, 0
    %v105 = vsel %vm94, %v56, 0
    %v108 = vsel %vm94, %v57, 0
    %v111 = vsel %vm94, %v58, 0
    %v114 = vsel %vm94, %v59, 0
    %v117 = vsel %vm94, %v60, 0
    %v120 = vsel %vm94, %v61, 0
    %v123 = vsel %vm94, %v62, 0
    %v126 = vsel %vm94, %v63, 0
    %v129 = vsel %vm94, %v64, 0
    %v132 = vsel %vm94, %v65, 0
    %v135 = vsel %vm94, %v66, 0
    %v138 = vsel %vm94, %v67, 0
    %v141 = vsel %vm94, %v68, 0
    %v144 = vsel %vm94, %v69, 0
    %v147 = vsel %vm94, %v70, 0
    %v150 = vsel %vm94, %v71, 0
    %v153 = vsel %vm94, %v72, 0
    %v156 = vsel %vm94, %v73, 0
    %v159 = vsel %vm94, %v74, 0
    %v162 = vsel %vm94, %v75, 0
    %v165 = vsel %vm94, %v76, 0
    %v168 = vsel %vm94, %v77, 0
    %v171 = vsel %vm94, %v78, 0
    %v174 = vsel %vm94, %v79, 0
    %v177 = vsel %vm94, %v80, 0
    %v180 = vsel %vm94, %v81, 0
    %v183 = vsel %vm94, %v82, 0
    %v186 = vsel %vm94, %v83, 0
    %v189 = vsel %vm94, %v84, 0
    %191 = vmatprep.subr.mxu0 0.0
    %192 = vmatpush1.msra.mxu0 %v90
    %193 = vmatprep.subr.mxu0 0.0
    %194 = vmatpush1.msra.mxu0 %v91
    %195 = vmatprep.subr.mxu0 0.0
    %196 = vmatpush1.msra.mxu0 %v92
    %197 = vmatprep.subr.mxu0 0.0
    %198 = vmatpush1.msra.mxu0 %v93
    %199 = vmatprep.subr.mxu0 0.0
    %200 = vmatpush1.msra.mxu0 0.0
    %201 = vmatprep.subr.mxu0 0.0
    %202 = vmatpush1.msra.mxu0 0.0
    %203 = vmatprep.subr.mxu0 0.0
    %204 = vmatpush1.msra.mxu0 0.0
    %205 = vmatprep.subr.mxu0 0.0
    %206 = vmatpush1.msra.mxu0 0.0
    %207 = vmatprep.subr.mxu0 0.0
    %208 = vmatpush1.msra.mxu0 0.0
    %209 = vmatprep.subr.mxu0 0.0
    %210 = vmatpush1.msra.mxu0 0.0
    %211 = vmatprep.subr.mxu0 0.0
    %212 = vmatpush1.msra.mxu0 0.0
    %213 = vmatprep.subr.mxu0 0.0
    %214 = vmatpush1.msra.mxu0 0.0
    %215 = vmatprep.subr.mxu0 0.0
    %216 = vmatpush1.msra.mxu0 0.0
    %217 = vmatprep.subr.mxu0 0.0
    %218 = vmatpush1.msra.mxu0 0.0
    %219 = vmatprep.subr.mxu0 0.0
    %220 = vmatpush1.msra.mxu0 0.0
    %221 = vmatprep.subr.mxu0 0.0
    %222 = vmatpush1.msra.mxu0 0.0
    %223 = vmatprep.subr.mxu0 0.0
    %224 = vmatpush1.msra.mxu0 0.0
    %225 = vmatprep.subr.mxu0 0.0
    %226 = vmatpush1.msra.mxu0 0.0
    %227 = vmatprep.subr.mxu0 0.0
    %228 = vmatpush1.msra.mxu0 0.0
    %229 = vmatprep.subr.mxu0 0.0
    %230 = vmatpush1.msra.mxu0 0.0
    %231 = vmatprep.subr.mxu0 0.0
    %232 = vmatpush1.msra.mxu0 0.0
    %233 = vmatprep.subr.mxu0 0.0
    %234 = vmatpush1.msra.mxu0 0.0
    %235 = vmatprep.subr.mxu0 0.0
    %236 = vmatpush1.msra.mxu0 0.0
    %237 = vmatprep.subr.mxu0 0.0
    %238 = vmatpush1.msra.mxu0 0.0
    %239 = vmatprep.subr.mxu0 0.0
    %240 = vmatpush1.msra.mxu0 0.0
    %241 = vmatprep.subr.mxu0 0.0
    %242 = vmatpush1.msra.mxu0 0.0
    %243 = vmatprep.subr.mxu0 0.0
    %244 = vmatpush1.msra.mxu0 0.0
    %245 = vmatprep.subr.mxu0 0.0
    %246 = vmatpush1.msra.mxu0 0.0
    %247 = vmatprep.subr.mxu0 0.0
    %248 = vmatpush1.msra.mxu0 0.0
    %249 = vmatprep.subr.mxu0 0.0
    %250 = vmatpush1.msra.mxu0 0.0
    %251 = vmatprep.subr.mxu0 0.0
    %252 = vmatpush1.msra.mxu0 0.0
    %253 = vmatprep.subr.mxu0 0.0
    %254 = vmatpush1.msra.mxu0 0.0
    %255 = vmatprep.mubr.f32.mxu0 0.0
    %256 = vmatmul.mubr.f32.gmra.mrb[0].mxu0 %v96
    %v257 = vpop.f32.mrb[0].mxu0
    %v258 = vadd.f32 0.0, %v257
    %v259 = vpop.f32.mrb[0].mxu0
    %260 = vmatprep.mubr.f32.mxu0 0.0
    %261 = vmatmul.mubr.f32.gmra.mrb[0].mxu0 %v99
    %v262 = vpop.f32.mrb[0].mxu0
    %v263 = vadd.f32 0.0, %v262
    %v264 = vpop.f32.mrb[0].mxu0
    %265 = vmatprep.mubr.f32.mxu0 0.0
    %266 = vmatmul.mubr.f32.gmra.mrb[0].mxu0 %v102
    %v267 = vpop.f32.mrb[0].mxu0
    %v268 = vadd.f32 0.0, %v267
    %v269 = vpop.f32.mrb[0].mxu0
    %270 = vmatprep.mubr.f32.mxu0 0.0
    %271 = vmatmul.mubr.f32.gmra.mrb[0].mxu0 %v105
    %v272 = vpop.f32.mrb[0].mxu0
    %v273 = vadd.f32 0.0, %v272
    %v274 = vpop.f32.mrb[0].mxu0
    %275 = vmatprep.mubr.f32.mxu0 0.0
    %276 = vmatmul.mubr.f32.gmra.mrb[0].mxu0 %v108
    %v277 = vpop.f32.mrb[0].mxu0
    %v278 = vadd.f32 0.0, %v277
    %v279 = vpop.f32.mrb[0].mxu0
    %280 = vmatprep.mubr.f32.mxu0 0.0
    %281 = vmatmul.mubr.f32.gmra.mrb[0].mxu0 %v111
    %v282 = vpop.f32.mrb[0].mxu0
    %v283 = vadd.f32 0.0, %v282
    %v284 = vpop.f32.mrb[0].mxu0
    %285 = vmatprep.mubr.f32.mxu0 0.0
    %286 = vmatmul.mubr.f32.gmra.mrb[0].mxu0 %v114
    %v287 = vpop.f32.mrb[0].mxu0
    %v288 = vadd.f32 0.0, %v287
    %v289 = vpop.f32.mrb[0].mxu0
    %290 = vmatprep.mubr.f32.mxu0 0.0
    %291 = vmatmul.mubr.f32.gmra.mrb[0].mxu0 %v117
    %v292 = vpop.f32.mrb[0].mxu0
    %v293 = vadd.f32 0.0, %v292
    %v294 = vpop.f32.mrb[0].mxu0
    %295 = vmatprep.mubr.f32.mxu0 0.0
    %296 = vmatmul.mubr.f32.gmra.mrb[0].mxu0 %v120
    %v297 = vpop.f32.mrb[0].mxu0
    %v298 = vadd.f32 0.0, %v297
    %v299 = vpop.f32.mrb[0].mxu0
    %300 = vmatprep.mubr.f32.mxu0 0.0
    %301 = vmatmul.mubr.f32.gmra.mrb[0].mxu0 %v123
    %v302 = vpop.f32.mrb[0].mxu0
    %v303 = vadd.f32 0.0, %v302
    %v304 = vpop.f32.mrb[0].mxu0
    %305 = vmatprep.mubr.f32.mxu0 0.0
    %306 = vmatmul.mubr.f32.gmra.mrb[0].mxu0 %v126
    %v307 = vpop.f32.mrb[0].mxu0
    %v308 = vadd.f32 0.0, %v307
    %v309 = vpop.f32.mrb[0].mxu0
    %310 = vmatprep.mubr.f32.mxu0 0.0
    %311 = vmatmul.mubr.f32.gmra.mrb[0].mxu0 %v129
    %v312 = vpop.f32.mrb[0].mxu0
    %v313 = vadd.f32 0.0, %v312
    %v314 = vpop.f32.mrb[0].mxu0
    %315 = vmatprep.mubr.f32.mxu0 0.0
    %316 = vmatmul.mubr.f32.gmra.mrb[0].mxu0 %v132
    %v317 = vpop.f32.mrb[0].mxu0
    %v318 = vadd.f32 0.0, %v317
    %v319 = vpop.f32.mrb[0].mxu0
    %320 = vmatprep.mubr.f32.mxu0 0.0
    %321 = vmatmul.mubr.f32.gmra.mrb[0].mxu0 %v135
    %v322 = vpop.f32.mrb[0].mxu0
    %v323 = vadd.f32 0.0, %v322
    %v324 = vpop.f32.mrb[0].mxu0
    %325 = vmatprep.mubr.f32.mxu0 0.0
    %326 = vmatmul.mubr.f32.gmra.mrb[0].mxu0 %v138
    %v327 = vpop.f32.mrb[0].mxu0
    %v328 = vadd.f32 0.0, %v327
    %v329 = vpop.f32.mrb[0].mxu0
    %330 = vmatprep.mubr.f32.mxu0 0.0
    %331 = vmatmul.mubr.f32.gmra.mrb[0].mxu0 %v141
    %v332 = vpop.f32.mrb[0].mxu0
    %v333 = vadd.f32 0.0, %v332
    %v334 = vpop.f32.mrb[0].mxu0
    %335 = vmatprep.mubr.f32.mxu0 0.0
    %336 = vmatmul.mubr.f32.gmra.mrb[0].mxu0 %v144
    %v337 = vpop.f32.mrb[0].mxu0
    %v338 = vadd.f32 0.0, %v337
    %v339 = vpop.f32.mrb[0].mxu0
    %340 = vmatprep.mubr.f32.mxu0 0.0
    %341 = vmatmul.mubr.f32.gmra.mrb[0].mxu0 %v147
    %v342 = vpop.f32.mrb[0].mxu0
    %v343 = vadd.f32 0.0, %v342
    %v344 = vpop.f32.mrb[0].mxu0
    %345 = vmatprep.mubr.f32.mxu0 0.0
    %346 = vmatmul.mubr.f32.gmra.mrb[0].mxu0 %v150
    %v347 = vpop.f32.mrb[0].mxu0
    %v348 = vadd.f32 0.0, %v347
    %v349 = vpop.f32.mrb[0].mxu0
    %350 = vmatprep.mubr.f32.mxu0 0.0
    %351 = vmatmul.mubr.f32.gmra.mrb[0].mxu0 %v153
    %v352 = vpop.f32.mrb[0].mxu0
    %v353 = vadd.f32 0.0, %v352
    %v354 = vpop.f32.mrb[0].mxu0
    %355 = vmatprep.mubr.f32.mxu0 0.0
    %356 = vmatmul.mubr.f32.gmra.mrb[0].mxu0 %v156
    %v357 = vpop.f32.mrb[0].mxu0
    %v358 = vadd.f32 0.0, %v357
    %v359 = vpop.f32.mrb[0].mxu0
    %360 = vmatprep.mubr.f32.mxu0 0.0
    %361 = vmatmul.mubr.f32.gmra.mrb[0].mxu0 %v159
    %v362 = vpop.f32.mrb[0].mxu0
    %v363 = vadd.f32 0.0, %v362
    %v364 = vpop.f32.mrb[0].mxu0
    %365 = vmatprep.mubr.f32.mxu0 0.0
    %366 = vmatmul.mubr.f32.gmra.mrb[0].mxu0 %v162
    %v367 = vpop.f32.mrb[0].mxu0
    %v368 = vadd.f32 0.0, %v367
    %v369 = vpop.f32.mrb[0].mxu0
    %370 = vmatprep.mubr.f32.mxu0 0.0
    %371 = vmatmul.mubr.f32.gmra.mrb[0].mxu0 %v165
    %v372 = vpop.f32.mrb[0].mxu0
    %v373 = vadd.f32 0.0, %v372
    %v374 = vpop.f32.mrb[0].mxu0
    %375 = vmatprep.mubr.f32.mxu0 0.0
    %376 = vmatmul.mubr.f32.gmra.mrb[0].mxu0 %v168
    %v377 = vpop.f32.mrb[0].mxu0
    %v378 = vadd.f32 0.0, %v377
    %v379 = vpop.f32.mrb[0].mxu0
    %380 = vmatprep.mubr.f32.mxu0 0.0
    %381 = vmatmul.mubr.f32.gmra.mrb[0].mxu0 %v171
    %v382 = vpop.f32.mrb[0].mxu0
    %v383 = vadd.f32 0.0, %v382
    %v384 = vpop.f32.mrb[0].mxu0
    %385 = vmatprep.mubr.f32.mxu0 0.0
    %386 = vmatmul.mubr.f32.gmra.mrb[0].mxu0 %v174
    %v387 = vpop.f32.mrb[0].mxu0
    %v388 = vadd.f32 0.0, %v387
    %v389 = vpop.f32.mrb[0].mxu0
    %390 = vmatprep.mubr.f32.mxu0 0.0
    %391 = vmatmul.mubr.f32.gmra.mrb[0].mxu0 %v177
    %v392 = vpop.f32.mrb[0].mxu0
    %v393 = vadd.f32 0.0, %v392
    %v394 = vpop.f32.mrb[0].mxu0
    %395 = vmatprep.mubr.f32.mxu0 0.0
    %396 = vmatmul.mubr.f32.gmra.mrb[0].mxu0 %v180
    %v397 = vpop.f32.mrb[0].mxu0
    %v398 = vadd.f32 0.0, %v397
    %v399 = vpop.f32.mrb[0].mxu0
    %400 = vmatprep.mubr.f32.mxu0 0.0
    %401 = vmatmul.mubr.f32.gmra.mrb[0].mxu0 %v183
    %v402 = vpop.f32.mrb[0].mxu0
    %v403 = vadd.f32 0.0, %v402
    %v404 = vpop.f32.mrb[0].mxu0
    %405 = vmatprep.mubr.f32.mxu0 0.0
    %406 = vmatmul.mubr.f32.gmra.mrb[0].mxu0 %v186
    %v407 = vpop.f32.mrb[0].mxu0
    %v408 = vadd.f32 0.0, %v407
    %v409 = vpop.f32.mrb[0].mxu0
    %410 = vmatprep.mubr.f32.mxu0 0.0
    %411 = vmatmul.mubr.f32.gmra.mrb[0].mxu0 %v189
    %v412 = vpop.f32.mrb[0].mxu0
    %v413 = vadd.f32 0.0, %v412
    %v414 = vpop.f32.mrb[0].mxu0
    %415 = vdwg.mxu0
    %v417 = vsel %vm94, 0.0, 0
    %419 = vmatprep.subr.mxu0 0.0
    %420 = vmatpush1.msra.mxu0 %v85
    %421 = vmatprep.subr.mxu0 0.0
    %422 = vmatpush1.msra.mxu0 %v86
    %423 = vmatprep.subr.mxu0 0.0
    %424 = vmatpush1.msra.mxu0 %v87
    %425 = vmatprep.subr.mxu0 0.0
    %426 = vmatpush1.msra.mxu0 %v88
    %427 = vmatprep.subr.mxu0 0.0
    %428 = vmatpush1.msra.mxu0 0.0
    %429 = vmatprep.subr.mxu0 0.0
    %430 = vmatpush1.msra.mxu0 0.0
    %431 = vmatprep.subr.mxu0 0.0
    %432 = vmatpush1.msra.mxu0 0.0
    %433 = vmatprep.subr.mxu0 0.0
    %434 = vmatpush1.msra.mxu0 0.0
    %435 = vmatprep.subr.mxu0 0.0
    %436 = vmatpush1.msra.mxu0 0.0
    %437 = vmatprep.subr.mxu0 0.0
    %438 = vmatpush1.msra.mxu0 0.0
    %439 = vmatprep.subr.mxu0 0.0
    %440 = vmatpush1.msra.mxu0 0.0
    %441 = vmatprep.subr.mxu0 0.0
    %442 = vmatpush1.msra.mxu0 0.0
    %443 = vmatprep.subr.mxu0 0.0
    %444 = vmatpush1.msra.mxu0 0.0
    %445 = vmatprep.subr.mxu0 0.0
    %446 = vmatpush1.msra.mxu0 0.0
    %447 = vmatprep.subr.mxu0 0.0
    %448 = vmatpush1.msra.mxu0 0.0
    %449 = vmatprep.subr.mxu0 0.0
    %450 = vmatpush1.msra.mxu0 0.0
    %451 = vmatprep.subr.mxu0 0.0
    %452 = vmatpush1.msra.mxu0 0.0
    %453 = vmatprep.subr.mxu0 0.0
    %454 = vmatpush1.msra.mxu0 0.0
    %455 = vmatprep.subr.mxu0 0.0
    %456 = vmatpush1.msra.mxu0 0.0
    %457 = vmatprep.subr.mxu0 0.0
    %458 = vmatpush1.msra.mxu0 0.0
    %459 = vmatprep.subr.mxu0 0.0
    %460 = vmatpush1.msra.mxu0 0.0
    %461 = vmatprep.subr.mxu0 0.0
    %462 = vmatpush1.msra.mxu0 0.0
    %463 = vmatprep.subr.mxu0 0.0
    %464 = vmatpush1.msra.mxu0 0.0
    %465 = vmatprep.subr.mxu0 0.0
    %466 = vmatpush1.msra.mxu0 0.0
    %467 = vmatprep.subr.mxu0 0.0
    %468 = vmatpush1.msra.mxu0 0.0
    %469 = vmatprep.subr.mxu0 0.0
    %470 = vmatpush1.msra.mxu0 0.0
    %471 = vmatprep.subr.mxu0 0.0
    %472 = vmatpush1.msra.mxu0 0.0
    %473 = vmatprep.subr.mxu0 0.0
    %474 = vmatpush1.msra.mxu0 0.0
    %475 = vmatprep.subr.mxu0 0.0
    %476 = vmatpush1.msra.mxu0 0.0
    %477 = vmatprep.subr.mxu0 0.0
    %478 = vmatpush1.msra.mxu0 0.0
    %479 = vmatprep.subr.mxu0 0.0
    %480 = vmatpush1.msra.mxu0 0.0
    %481 = vmatprep.subr.mxu0 0.0
    %482 = vmatpush1.msra.mxu0 0.0
    %483 = vmatprep.mubr.f32.mxu0 0.0
    %484 = vmatmul.mubr.f32.gmra.mrb[0].mxu0 %v417
    %v485 = vpop.f32.mrb[0].mxu0
    %v486 = vadd.f32 %v258, %v485
    %v487 = vpop.f32.mrb[0].mxu0
    %488 = vmatprep.mubr.f32.mxu0 0.0
    %489 = vmatmul.mubr.f32.gmra.mrb[0].mxu0 %v96
    %v490 = vpop.f32.mrb[0].mxu0
    %v491 = vadd.f32 %v263, %v490
    %v492 = vpop.f32.mrb[0].mxu0
    %493 = vmatprep.mubr.f32.mxu0 0.0
    %494 = vmatmul.mubr.f32.gmra.mrb[0].mxu0 %v99
    %v495 = vpop.f32.mrb[0].mxu0
    %v496 = vadd.f32 %v268, %v495
    %v497 = vpop.f32.mrb[0].mxu0
    %498 = vmatprep.mubr.f32.mxu0 0.0
    %499 = vmatmul.mubr.f32.gmra.mrb[0].mxu0 %v102
    %v500 = vpop.f32.mrb[0].mxu0
    %v501 = vadd.f32 %v273, %v500
    %v502 = vpop.f32.mrb[0].mxu0
    %503 = vmatprep.mubr.f32.mxu0 0.0
    %504 = vmatmul.mubr.f32.gmra.mrb[0].mxu0 %v105
    %v505 = vpop.f32.mrb[0].mxu0
    %v506 = vadd.f32 %v278, %v505
    %v507 = vpop.f32.mrb[0].mxu0
    %508 = vmatprep.mubr.f32.mxu0 0.0
    %509 = vmatmul.mubr.f32.gmra.mrb[0].mxu0 %v108
    %v510 = vpop.f32.mrb[0].mxu0
    %v511 = vadd.f32 %v283, %v510
    %v512 = vpop.f32.mrb[0].mxu0
    %513 = vmatprep.mubr.f32.mxu0 0.0
    %514 = vmatmul.mubr.f32.gmra.mrb[0].mxu0 %v111
    %v515 = vpop.f32.mrb[0].mxu0
    %v516 = vadd.f32 %v288, %v515
    %v517 = vpop.f32.mrb[0].mxu0
    %518 = vmatprep.mubr.f32.mxu0 0.0
    %519 = vmatmul.mubr.f32.gmra.mrb[0].mxu0 %v114
    %v520 = vpop.f32.mrb[0].mxu0
    %v521 = vadd.f32 %v293, %v520
    %v522 = vpop.f32.mrb[0].mxu0
    %523 = vmatprep.mubr.f32.mxu0 0.0
    %524 = vmatmul.mubr.f32.gmra.mrb[0].mxu0 %v117
    %v525 = vpop.f32.mrb[0].mxu0
    %v526 = vadd.f32 %v298, %v525
    %v527 = vpop.f32.mrb[0].mxu0
    %528 = vmatprep.mubr.f32.mxu0 0.0
    %529 = vmatmul.mubr.f32.gmra.mrb[0].mxu0 %v120
    %v530 = vpop.f32.mrb[0].mxu0
    %v531 = vadd.f32 %v303, %v530
    %v532 = vpop.f32.mrb[0].mxu0
    %533 = vmatprep.mubr.f32.mxu0 0.0
    %534 = vmatmul.mubr.f32.gmra.mrb[0].mxu0 %v123
    %v535 = vpop.f32.mrb[0].mxu0
    %v536 = vadd.f32 %v308, %v535
    %v537 = vpop.f32.mrb[0].mxu0
    %538 = vmatprep.mubr.f32.mxu0 0.0
    %539 = vmatmul.mubr.f32.gmra.mrb[0].mxu0 %v126
    %v540 = vpop.f32.mrb[0].mxu0
    %v541 = vadd.f32 %v313, %v540
    %v542 = vpop.f32.mrb[0].mxu0
    %543 = vmatprep.mubr.f32.mxu0 0.0
    %544 = vmatmul.mubr.f32.gmra.mrb[0].mxu0 %v129
    %v545 = vpop.f32.mrb[0].mxu0
    %v546 = vadd.f32 %v318, %v545
    %v547 = vpop.f32.mrb[0].mxu0
    %548 = vmatprep.mubr.f32.mxu0 0.0
    %549 = vmatmul.mubr.f32.gmra.mrb[0].mxu0 %v132
    %v550 = vpop.f32.mrb[0].mxu0
    %v551 = vadd.f32 %v323, %v550
    %v552 = vpop.f32.mrb[0].mxu0
    %553 = vmatprep.mubr.f32.mxu0 0.0
    %554 = vmatmul.mubr.f32.gmra.mrb[0].mxu0 %v135
    %v555 = vpop.f32.mrb[0].mxu0
    %v556 = vadd.f32 %v328, %v555
    %v557 = vpop.f32.mrb[0].mxu0
    %558 = vmatprep.mubr.f32.mxu0 0.0
    %559 = vmatmul.mubr.f32.gmra.mrb[0].mxu0 %v138
    %v560 = vpop.f32.mrb[0].mxu0
    %v561 = vadd.f32 %v333, %v560
    %v562 = vpop.f32.mrb[0].mxu0
    %563 = vmatprep.mubr.f32.mxu0 0.0
    %564 = vmatmul.mubr.f32.gmra.mrb[0].mxu0 %v141
    %v565 = vpop.f32.mrb[0].mxu0
    %v566 = vadd.f32 %v338, %v565
    %v567 = vpop.f32.mrb[0].mxu0
    %568 = vmatprep.mubr.f32.mxu0 0.0
    %569 = vmatmul.mubr.f32.gmra.mrb[0].mxu0 %v144
    %v570 = vpop.f32.mrb[0].mxu0
    %v571 = vadd.f32 %v343, %v570
    %v572 = vpop.f32.mrb[0].mxu0
    %573 = vmatprep.mubr.f32.mxu0 0.0
    %574 = vmatmul.mubr.f32.gmra.mrb[0].mxu0 %v147
    %v575 = vpop.f32.mrb[0].mxu0
    %v576 = vadd.f32 %v348, %v575
    %v577 = vpop.f32.mrb[0].mxu0
    %578 = vmatprep.mubr.f32.mxu0 0.0
    %579 = vmatmul.mubr.f32.gmra.mrb[0].mxu0 %v150
    %v580 = vpop.f32.mrb[0].mxu0
    %v581 = vadd.f32 %v353, %v580
    %v582 = vpop.f32.mrb[0].mxu0
    %583 = vmatprep.mubr.f32.mxu0 0.0
    %584 = vmatmul.mubr.f32.gmra.mrb[0].mxu0 %v153
    %v585 = vpop.f32.mrb[0].mxu0
    %v586 = vadd.f32 %v358, %v585
    %v587 = vpop.f32.mrb[0].mxu0
    %588 = vmatprep.mubr.f32.mxu0 0.0
    %589 = vmatmul.mubr.f32.gmra.mrb[0].mxu0 %v156
    %v590 = vpop.f32.mrb[0].mxu0
    %v591 = vadd.f32 %v363, %v590
    %v592 = vpop.f32.mrb[0].mxu0
    %593 = vmatprep.mubr.f32.mxu0 0.0
    %594 = vmatmul.mubr.f32.gmra.mrb[0].mxu0 %v159
    %v595 = vpop.f32.mrb[0].mxu0
    %v596 = vadd.f32 %v368, %v595
    %v597 = vpop.f32.mrb[0].mxu0
    %598 = vmatprep.mubr.f32.mxu0 0.0
    %599 = vmatmul.mubr.f32.gmra.mrb[0].mxu0 %v162
    %v600 = vpop.f32.mrb[0].mxu0
    %v601 = vadd.f32 %v373, %v600
    %v602 = vpop.f32.mrb[0].mxu0
    %603 = vmatprep.mubr.f32.mxu0 0.0
    %604 = vmatmul.mubr.f32.gmra.mrb[0].mxu0 %v165
    %v605 = vpop.f32.mrb[0].mxu0
    %v606 = vadd.f32 %v378, %v605
    %v607 = vpop.f32.mrb[0].mxu0
    %608 = vmatprep.mubr.f32.mxu0 0.0
    %609 = vmatmul.mubr.f32.gmra.mrb[0].mxu0 %v168
    %v610 = vpop.f32.mrb[0].mxu0
    %v611 = vadd.f32 %v383, %v610
    %v612 = vpop.f32.mrb[0].mxu0
    %613 = vmatprep.mubr.f32.mxu0 0.0
    %614 = vmatmul.mubr.f32.gmra.mrb[0].mxu0 %v171
    %v615 = vpop.f32.mrb[0].mxu0
    %v616 = vadd.f32 %v388, %v615
    %v617 = vpop.f32.mrb[0].mxu0
    %618 = vmatprep.mubr.f32.mxu0 0.0
    %619 = vmatmul.mubr.f32.gmra.mrb[0].mxu0 %v174
    %v620 = vpop.f32.mrb[0].mxu0
    %v621 = vadd.f32 %v393, %v620
    %v622 = vpop.f32.mrb[0].mxu0
    %623 = vmatprep.mubr.f32.mxu0 0.0
    %624 = vmatmul.mubr.f32.gmra.mrb[0].mxu0 %v177
    %v625 = vpop.f32.mrb[0].mxu0
    %v626 = vadd.f32 %v398, %v625
    %v627 = vpop.f32.mrb[0].mxu0
    %628 = vmatprep.mubr.f32.mxu0 0.0
    %629 = vmatmul.mubr.f32.gmra.mrb[0].mxu0 %v180
    %v630 = vpop.f32.mrb[0].mxu0
    %v631 = vadd.f32 %v403, %v630
    %v632 = vpop.f32.mrb[0].mxu0
    %633 = vmatprep.mubr.f32.mxu0 0.0
    %634 = vmatmul.mubr.f32.gmra.mrb[0].mxu0 %v183
    %v635 = vpop.f32.mrb[0].mxu0
    %v636 = vadd.f32 %v408, %v635
    %v637 = vpop.f32.mrb[0].mxu0
    %638 = vmatprep.mubr.f32.mxu0 0.0
    %639 = vmatmul.mubr.f32.gmra.mrb[0].mxu0 %v186
    %v640 = vpop.f32.mrb[0].mxu0
    %v641 = vadd.f32 %v413, %v640
    %v642 = vpop.f32.mrb[0].mxu0
    %643 = vdwg.mxu0
    %s644 = scalar_lea.vmem %s1, 64
    %v645 = vld [vmem:[%s644] sm:$0xff]
    %v646 = vld [vmem:[%s644 + $0x8] sm:$0xff]
    %v647 = vld [vmem:[%s644 + $0x10] sm:$0xff]
    %v648 = vld [vmem:[%s644 + $0x18] sm:$0xff]
    %649 = vmatprep.subr.mxu0 0.0
    %650 = vmatpush1.msra.mxu0 %v645
    %651 = vmatprep.subr.mxu0 0.0
    %652 = vmatpush1.msra.mxu0 %v646
    %653 = vmatprep.subr.mxu0 0.0
    %654 = vmatpush1.msra.mxu0 %v647
    %655 = vmatprep.subr.mxu0 0.0
    %656 = vmatpush1.msra.mxu0 %v648
    %657 = vmatprep.subr.mxu0 0.0
    %658 = vmatpush1.msra.mxu0 0.0
    %659 = vmatprep.subr.mxu0 0.0
    %660 = vmatpush1.msra.mxu0 0.0
    %661 = vmatprep.subr.mxu0 0.0
    %662 = vmatpush1.msra.mxu0 0.0
    %663 = vmatprep.subr.mxu0 0.0
    %664 = vmatpush1.msra.mxu0 0.0
    %665 = vmatprep.subr.mxu0 0.0
    %666 = vmatpush1.msra.mxu0 0.0
    %667 = vmatprep.subr.mxu0 0.0
    %668 = vmatpush1.msra.mxu0 0.0
    %669 = vmatprep.subr.mxu0 0.0
    %670 = vmatpush1.msra.mxu0 0.0
    %671 = vmatprep.subr.mxu0 0.0
    %672 = vmatpush1.msra.mxu0 0.0
    %673 = vmatprep.subr.mxu0 0.0
    %674 = vmatpush1.msra.mxu0 0.0
    %675 = vmatprep.subr.mxu0 0.0
    %676 = vmatpush1.msra.mxu0 0.0
    %677 = vmatprep.subr.mxu0 0.0
    %678 = vmatpush1.msra.mxu0 0.0
    %679 = vmatprep.subr.mxu0 0.0
    %680 = vmatpush1.msra.mxu0 0.0
    %681 = vmatprep.subr.mxu0 0.0
    %682 = vmatpush1.msra.mxu0 0.0
    %683 = vmatprep.subr.mxu0 0.0
    %684 = vmatpush1.msra.mxu0 0.0
    %685 = vmatprep.subr.mxu0 0.0
    %686 = vmatpush1.msra.mxu0 0.0
    %687 = vmatprep.subr.mxu0 0.0
    %688 = vmatpush1.msra.mxu0 0.0
    %689 = vmatprep.subr.mxu0 0.0
    %690 = vmatpush1.msra.mxu0 0.0
    %691 = vmatprep.subr.mxu0 0.0
    %692 = vmatpush1.msra.mxu0 0.0
    %693 = vmatprep.subr.mxu0 0.0
    %694 = vmatpush1.msra.mxu0 0.0
    %695 = vmatprep.subr.mxu0 0.0
    %696 = vmatpush1.msra.mxu0 0.0
    %697 = vmatprep.subr.mxu0 0.0
    %698 = vmatpush1.msra.mxu0 0.0
    %699 = vmatprep.subr.mxu0 0.0
    %700 = vmatpush1.msra.mxu0 0.0
    %701 = vmatprep.subr.mxu0 0.0
    %702 = vmatpush1.msra.mxu0 0.0
    %703 = vmatprep.subr.mxu0 0.0
    %704 = vmatpush1.msra.mxu0 0.0
    %705 = vmatprep.subr.mxu0 0.0
    %706 = vmatpush1.msra.mxu0 0.0
    %707 = vmatprep.subr.mxu0 0.0
    %708 = vmatpush1.msra.mxu0 0.0
    %709 = vmatprep.subr.mxu0 0.0
    %710 = vmatpush1.msra.mxu0 0.0
    %711 = vmatprep.subr.mxu0 0.0
    %712 = vmatpush1.msra.mxu0 0.0
    %713 = vmatprep.mubr.f32.mxu0 0.0
    %714 = vmatmul.mubr.f32.gmra.mrb[0].mxu0 %v99
    %v715 = vpop.f32.mrb[0].mxu0
    %v716 = vadd.f32 0.0, %v715
    %v717 = vpop.f32.mrb[0].mxu0
    %718 = vmatprep.mubr.f32.mxu0 0.0
    %719 = vmatmul.mubr.f32.gmra.mrb[0].mxu0 %v102
    %v720 = vpop.f32.mrb[0].mxu0
    %v721 = vadd.f32 0.0, %v720
    %v722 = vpop.f32.mrb[0].mxu0
    %723 = vmatprep.mubr.f32.mxu0 0.0
    %724 = vmatmul.mubr.f32.gmra.mrb[0].mxu0 %v105
    %v725 = vpop.f32.mrb[0].mxu0
    %v726 = vadd.f32 0.0, %v725
    %v727 = vpop.f32.mrb[0].mxu0
    %728 = vmatprep.mubr.f32.mxu0 0.0
    %729 = vmatmul.mubr.f32.gmra.mrb[0].mxu0 %v108
    %v730 = vpop.f32.mrb[0].mxu0
    %v731 = vadd.f32 0.0, %v730
    %v732 = vpop.f32.mrb[0].mxu0
    %733 = vmatprep.mubr.f32.mxu0 0.0
    %734 = vmatmul.mubr.f32.gmra.mrb[0].mxu0 %v111
    %v735 = vpop.f32.mrb[0].mxu0
    %v736 = vadd.f32 0.0, %v735
    %v737 = vpop.f32.mrb[0].mxu0
    %738 = vmatprep.mubr.f32.mxu0 0.0
    %739 = vmatmul.mubr.f32.gmra.mrb[0].mxu0 %v114
    %v740 = vpop.f32.mrb[0].mxu0
    %v741 = vadd.f32 0.0, %v740
    %v742 = vpop.f32.mrb[0].mxu0
    %743 = vmatprep.mubr.f32.mxu0 0.0
    %744 = vmatmul.mubr.f32.gmra.mrb[0].mxu0 %v117
    %v745 = vpop.f32.mrb[0].mxu0
    %v746 = vadd.f32 0.0, %v745
    %v747 = vpop.f32.mrb[0].mxu0
    %748 = vmatprep.mubr.f32.mxu0 0.0
    %749 = vmatmul.mubr.f32.gmra.mrb[0].mxu0 %v120
    %v750 = vpop.f32.mrb[0].mxu0
    %v751 = vadd.f32 0.0, %v750
    %v752 = vpop.f32.mrb[0].mxu0
    %753 = vmatprep.mubr.f32.mxu0 0.0
    %754 = vmatmul.mubr.f32.gmra.mrb[0].mxu0 %v123
    %v755 = vpop.f32.mrb[0].mxu0
    %v756 = vadd.f32 0.0, %v755
    %v757 = vpop.f32.mrb[0].mxu0
    %758 = vmatprep.mubr.f32.mxu0 0.0
    %759 = vmatmul.mubr.f32.gmra.mrb[0].mxu0 %v126
    %v760 = vpop.f32.mrb[0].mxu0
    %v761 = vadd.f32 0.0, %v760
    %v762 = vpop.f32.mrb[0].mxu0
    %763 = vmatprep.mubr.f32.mxu0 0.0
    %764 = vmatmul.mubr.f32.gmra.mrb[0].mxu0 %v129
    %v765 = vpop.f32.mrb[0].mxu0
    %v766 = vadd.f32 0.0, %v765
    %v767 = vpop.f32.mrb[0].mxu0
    %768 = vmatprep.mubr.f32.mxu0 0.0
    %769 = vmatmul.mubr.f32.gmra.mrb[0].mxu0 %v132
    %v770 = vpop.f32.mrb[0].mxu0
    %v771 = vadd.f32 0.0, %v770
    %v772 = vpop.f32.mrb[0].mxu0
    %773 = vmatprep.mubr.f32.mxu0 0.0
    %774 = vmatmul.mubr.f32.gmra.mrb[0].mxu0 %v135
    %v775 = vpop.f32.mrb[0].mxu0
    %v776 = vadd.f32 0.0, %v775
    %v777 = vpop.f32.mrb[0].mxu0
    %778 = vmatprep.mubr.f32.mxu0 0.0
    %779 = vmatmul.mubr.f32.gmra.mrb[0].mxu0 %v138
    %v780 = vpop.f32.mrb[0].mxu0
    %v781 = vadd.f32 0.0, %v780
    %v782 = vpop.f32.mrb[0].mxu0
    %783 = vmatprep.mubr.f32.mxu0 0.0
    %784 = vmatmul.mubr.f32.gmra.mrb[0].mxu0 %v141
    %v785 = vpop.f32.mrb[0].mxu0
    %v786 = vadd.f32 0.0, %v785
    %v787 = vpop.f32.mrb[0].mxu0
    %788 = vmatprep.mubr.f32.mxu0 0.0
    %789 = vmatmul.mubr.f32.gmra.mrb[0].mxu0 %v144
    %v790 = vpop.f32.mrb[0].mxu0
    %v791 = vadd.f32 0.0, %v790
    %v792 = vpop.f32.mrb[0].mxu0
    %793 = vmatprep.mubr.f32.mxu0 0.0
    %794 = vmatmul.mubr.f32.gmra.mrb[0].mxu0 %v147
    %v795 = vpop.f32.mrb[0].mxu0
    %v796 = vadd.f32 0.0, %v795
    %v797 = vpop.f32.mrb[0].mxu0
    %798 = vmatprep.mubr.f32.mxu0 0.0
    %799 = vmatmul.mubr.f32.gmra.mrb[0].mxu0 %v150
    %v800 = vpop.f32.mrb[0].mxu0
    %v801 = vadd.f32 0.0, %v800
    %v802 = vpop.f32.mrb[0].mxu0
    %803 = vmatprep.mubr.f32.mxu0 0.0
    %804 = vmatmul.mubr.f32.gmra.mrb[0].mxu0 %v153
    %v805 = vpop.f32.mrb[0].mxu0
    %v806 = vadd.f32 0.0, %v805
    %v807 = vpop.f32.mrb[0].mxu0
    %808 = vmatprep.mubr.f32.mxu0 0.0
    %809 = vmatmul.mubr.f32.gmra.mrb[0].mxu0 %v156
    %v810 = vpop.f32.mrb[0].mxu0
    %v811 = vadd.f32 0.0, %v810
    %v812 = vpop.f32.mrb[0].mxu0
    %813 = vmatprep.mubr.f32.mxu0 0.0
    %814 = vmatmul.mubr.f32.gmra.mrb[0].mxu0 %v159
    %v815 = vpop.f32.mrb[0].mxu0
    %v816 = vadd.f32 0.0, %v815
    %v817 = vpop.f32.mrb[0].mxu0
    %818 = vmatprep.mubr.f32.mxu0 0.0
    %819 = vmatmul.mubr.f32.gmra.mrb[0].mxu0 %v162
    %v820 = vpop.f32.mrb[0].mxu0
    %v821 = vadd.f32 0.0, %v820
    %v822 = vpop.f32.mrb[0].mxu0
    %823 = vmatprep.mubr.f32.mxu0 0.0
    %824 = vmatmul.mubr.f32.gmra.mrb[0].mxu0 %v165
    %v825 = vpop.f32.mrb[0].mxu0
    %v826 = vadd.f32 0.0, %v825
    %v827 = vpop.f32.mrb[0].mxu0
    %828 = vmatprep.mubr.f32.mxu0 0.0
    %829 = vmatmul.mubr.f32.gmra.mrb[0].mxu0 %v168
    %v830 = vpop.f32.mrb[0].mxu0
    %v831 = vadd.f32 0.0, %v830
    %v832 = vpop.f32.mrb[0].mxu0
    %833 = vmatprep.mubr.f32.mxu0 0.0
    %834 = vmatmul.mubr.f32.gmra.mrb[0].mxu0 %v171
    %v835 = vpop.f32.mrb[0].mxu0
    %v836 = vadd.f32 0.0, %v835
    %v837 = vpop.f32.mrb[0].mxu0
    %838 = vmatprep.mubr.f32.mxu0 0.0
    %839 = vmatmul.mubr.f32.gmra.mrb[0].mxu0 %v174
    %v840 = vpop.f32.mrb[0].mxu0
    %v841 = vadd.f32 0.0, %v840
    %v842 = vpop.f32.mrb[0].mxu0
    %843 = vmatprep.mubr.f32.mxu0 0.0
    %844 = vmatmul.mubr.f32.gmra.mrb[0].mxu0 %v177
    %v845 = vpop.f32.mrb[0].mxu0
    %v846 = vadd.f32 0.0, %v845
    %v847 = vpop.f32.mrb[0].mxu0
    %848 = vmatprep.mubr.f32.mxu0 0.0
    %849 = vmatmul.mubr.f32.gmra.mrb[0].mxu0 %v180
    %v850 = vpop.f32.mrb[0].mxu0
    %v851 = vadd.f32 0.0, %v850
    %v852 = vpop.f32.mrb[0].mxu0
    %853 = vmatprep.mubr.f32.mxu0 0.0
    %854 = vmatmul.mubr.f32.gmra.mrb[0].mxu0 %v183
    %v855 = vpop.f32.mrb[0].mxu0
    %v856 = vadd.f32 0.0, %v855
    %v857 = vpop.f32.mrb[0].mxu0
    %858 = vmatprep.mubr.f32.mxu0 0.0
    %859 = vmatmul.mubr.f32.gmra.mrb[0].mxu0 %v186
    %v860 = vpop.f32.mrb[0].mxu0
    %v861 = vadd.f32 0.0, %v860
    %v862 = vpop.f32.mrb[0].mxu0
    %863 = vmatprep.mubr.f32.mxu0 0.0
    %864 = vmatmul.mubr.f32.gmra.mrb[0].mxu0 %v189
    %v865 = vpop.f32.mrb[0].mxu0
    %v866 = vadd.f32 0.0, %v865
    %v867 = vpop.f32.mrb[0].mxu0
    %868 = vmatprep.mubr.f32.mxu0 0.0
    %869 = vmatmul.mubr.f32.gmra.mrb[0].mxu0 %v417
    %v870 = vpop.f32.mrb[0].mxu0
    %v871 = vadd.f32 0.0, %v870
    %v872 = vpop.f32.mrb[0].mxu0
    %873 = vdwg.mxu0
    %v874 = vadd.f32 %v486, %v716
    %v875 = vadd.f32 %v491, %v721
    %v876 = vadd.f32 %v496, %v726
    %v877 = vadd.f32 %v501, %v731
    %v878 = vadd.f32 %v506, %v736
    %v879 = vadd.f32 %v511, %v741
    %v880 = vadd.f32 %v516, %v746
    %v881 = vadd.f32 %v521, %v751
    %v882 = vadd.f32 %v526, %v756
    %v883 = vadd.f32 %v531, %v761
    %v884 = vadd.f32 %v536, %v766
    %v885 = vadd.f32 %v541, %v771
    %v886 = vadd.f32 %v546, %v776
    %v887 = vadd.f32 %v551, %v781
    %v888 = vadd.f32 %v556, %v786
    %v889 = vadd.f32 %v561, %v791
    %v890 = vadd.f32 %v566, %v796
    %v891 = vadd.f32 %v571, %v801
    %v892 = vadd.f32 %v576, %v806
    %v893 = vadd.f32 %v581, %v811
    %v894 = vadd.f32 %v586, %v816
    %v895 = vadd.f32 %v591, %v821
    %v896 = vadd.f32 %v596, %v826
    %v897 = vadd.f32 %v601, %v831
    %v898 = vadd.f32 %v606, %v836
    %v899 = vadd.f32 %v611, %v841
    %v900 = vadd.f32 %v616, %v846
    %v901 = vadd.f32 %v621, %v851
    %v902 = vadd.f32 %v626, %v856
    %v903 = vadd.f32 %v631, %v861
    %v904 = vadd.f32 %v636, %v866
    %v905 = vadd.f32 %v641, %v871
    %v906 = vld [vmem:[%s2] sm:$0x1]
    %v908 = vlaneseq
    %v909 = vshrl.u32 %v908, 7
    %v910 = vsub.s32 0, %v909
    %v911 = vrot.slane %v906, %v910
    %v913 = vadd.f32 %v874, %v911
    %v914 = vadd.f32 %v875, %v911
    %v915 = vadd.f32 %v876, %v911
    %v916 = vadd.f32 %v877, %v911
    %v917 = vadd.f32 %v878, %v911
    %v918 = vadd.f32 %v879, %v911
    %v919 = vadd.f32 %v880, %v911
    %v920 = vadd.f32 %v881, %v911
    %v921 = vadd.f32 %v882, %v911
    %v922 = vadd.f32 %v883, %v911
    %v923 = vadd.f32 %v884, %v911
    %v924 = vadd.f32 %v885, %v911
    %v925 = vadd.f32 %v886, %v911
    %v926 = vadd.f32 %v887, %v911
    %v927 = vadd.f32 %v888, %v911
    %v928 = vadd.f32 %v889, %v911
    %v929 = vadd.f32 %v890, %v911
    %v930 = vadd.f32 %v891, %v911
    %v931 = vadd.f32 %v892, %v911
    %v932 = vadd.f32 %v893, %v911
    %v933 = vadd.f32 %v894, %v911
    %v934 = vadd.f32 %v895, %v911
    %v935 = vadd.f32 %v896, %v911
    %v936 = vadd.f32 %v897, %v911
    %v937 = vadd.f32 %v898, %v911
    %v938 = vadd.f32 %v899, %v911
    %v939 = vadd.f32 %v900, %v911
    %v940 = vadd.f32 %v901, %v911
    %v941 = vadd.f32 %v902, %v911
    %v942 = vadd.f32 %v903, %v911
    %v943 = vadd.f32 %v904, %v911
    %v944 = vadd.f32 %v905, %v911
    %v945 = vmax.f32 %v913, 0.0
    %v946 = vmax.f32 %v914, 0.0
    %v947 = vmax.f32 %v915, 0.0
    %v948 = vmax.f32 %v916, 0.0
    %v949 = vmax.f32 %v917, 0.0
    %v950 = vmax.f32 %v918, 0.0
    %v951 = vmax.f32 %v919, 0.0
    %v952 = vmax.f32 %v920, 0.0
    %v953 = vmax.f32 %v921, 0.0
    %v954 = vmax.f32 %v922, 0.0
    %v955 = vmax.f32 %v923, 0.0
    %v956 = vmax.f32 %v924, 0.0
    %v957 = vmax.f32 %v925, 0.0
    %v958 = vmax.f32 %v926, 0.0
    %v959 = vmax.f32 %v927, 0.0
    %v960 = vmax.f32 %v928, 0.0
    %v961 = vmax.f32 %v929, 0.0
    %v962 = vmax.f32 %v930, 0.0
    %v963 = vmax.f32 %v931, 0.0
    %v964 = vmax.f32 %v932, 0.0
    %v965 = vmax.f32 %v933, 0.0
    %v966 = vmax.f32 %v934, 0.0
    %v967 = vmax.f32 %v935, 0.0
    %v968 = vmax.f32 %v936, 0.0
    %v969 = vmax.f32 %v937, 0.0
    %v970 = vmax.f32 %v938, 0.0
    %v971 = vmax.f32 %v939, 0.0
    %v972 = vmax.f32 %v940, 0.0
    %v973 = vmax.f32 %v941, 0.0
    %v974 = vmax.f32 %v942, 0.0
    %v975 = vmax.f32 %v943, 0.0
    %v976 = vmax.f32 %v944, 0.0
    %v977 = vmax.f32 %v945, %v946
    %v978 = vmax.f32 %v947, %v948
    %v979 = vmax.f32 %v949, %v950
    %v980 = vmax.f32 %v951, %v952
    %v981 = vmax.f32 %v953, %v954
    %v982 = vmax.f32 %v955, %v956
    %v983 = vmax.f32 %v957, %v958
    %v984 = vmax.f32 %v959, %v960
    %v985 = vmax.f32 %v961, %v962
    %v986 = vmax.f32 %v963, %v964
    %v987 = vmax.f32 %v965, %v966
    %v988 = vmax.f32 %v967, %v968
    %v989 = vmax.f32 %v969, %v970
    %v990 = vmax.f32 %v971, %v972
    %v991 = vmax.f32 %v973, %v974
    %v992 = vmax.f32 %v975, %v976
    %993 = vrot.lane.b32.xlu0 %v977, 124
    %v994 = vpop.permute.xlu0 %993
    %995 = vrot.lane.b32.xlu0 %v978, 124
    %v996 = vpop.permute.xlu0 %995
    %997 = vrot.lane.b32.xlu0 %v979, 124
    %v998 = vpop.permute.xlu0 %997
    %999 = vrot.lane.b32.xlu0 %v980, 124
    %v1000 = vpop.permute.xlu0 %999
    %1001 = vrot.lane.b32.xlu0 %v981, 124
    %v1002 = vpop.permute.xlu0 %1001
    %1003 = vrot.lane.b32.xlu0 %v982, 124
    %v1004 = vpop.permute.xlu0 %1003
    %1005 = vrot.lane.b32.xlu0 %v983, 124
    %v1006 = vpop.permute.xlu0 %1005
    %1007 = vrot.lane.b32.xlu0 %v984, 124
    %v1008 = vpop.permute.xlu0 %1007
    %1009 = vrot.lane.b32.xlu0 %v985, 124
    %v1010 = vpop.permute.xlu0 %1009
    %1011 = vrot.lane.b32.xlu0 %v986, 124
    %v1012 = vpop.permute.xlu0 %1011
    %1013 = vrot.lane.b32.xlu0 %v987, 124
    %v1014 = vpop.permute.xlu0 %1013
    %1015 = vrot.lane.b32.xlu0 %v988, 124
    %v1016 = vpop.permute.xlu0 %1015
    %1017 = vrot.lane.b32.xlu0 %v989, 124
    %v1018 = vpop.permute.xlu0 %1017
    %1019 = vrot.lane.b32.xlu0 %v990, 124
    %v1020 = vpop.permute.xlu0 %1019
    %1021 = vrot.lane.b32.xlu0 %v991, 124
    %v1022 = vpop.permute.xlu0 %1021
    %1023 = vrot.lane.b32.xlu0 %v992, 124
    %v1024 = vpop.permute.xlu0 %1023
    %v1025 = vmax.f32 %v977, %v994
    %v1026 = vmax.f32 %v978, %v996
    %v1027 = vmax.f32 %v979, %v998
    %v1028 = vmax.f32 %v980, %v1000
    %v1029 = vmax.f32 %v981, %v1002
    %v1030 = vmax.f32 %v982, %v1004
    %v1031 = vmax.f32 %v983, %v1006
    %v1032 = vmax.f32 %v984, %v1008
    %v1033 = vmax.f32 %v985, %v1010
    %v1034 = vmax.f32 %v986, %v1012
    %v1035 = vmax.f32 %v987, %v1014
    %v1036 = vmax.f32 %v988, %v1016
    %v1037 = vmax.f32 %v989, %v1018
    %v1038 = vmax.f32 %v990, %v1020
    %v1039 = vmax.f32 %v991, %v1022
    %v1040 = vmax.f32 %v992, %v1024
    %v1041 = vld [vmem:[%s3] sm:$0xff]
    %v1042 = vld [vmem:[%s3 + $0x8] sm:$0xff]
    %v1043 = vld [vmem:[%s3 + $0x10] sm:$0xff]
    %v1044 = vld [vmem:[%s3 + $0x18] sm:$0xff]
    %v1045 = vld [vmem:[%s3 + $0x20] sm:$0xff]
    %v1046 = vld [vmem:[%s3 + $0x28] sm:$0xff]
    %v1047 = vld [vmem:[%s3 + $0x30] sm:$0xff]
    %v1048 = vld [vmem:[%s3 + $0x38] sm:$0xff]
    %v1049 = vld [vmem:[%s3 + $0x40] sm:$0xff]
    %v1050 = vld [vmem:[%s3 + $0x48] sm:$0xff]
    %v1051 = vld [vmem:[%s3 + $0x50] sm:$0xff]
    %v1052 = vld [vmem:[%s3 + $0x58] sm:$0xff]
    %v1053 = vld [vmem:[%s3 + $0x60] sm:$0xff]
    %v1054 = vld [vmem:[%s3 + $0x68] sm:$0xff]
    %v1055 = vld [vmem:[%s3 + $0x70] sm:$0xff]
    %v1056 = vld [vmem:[%s3 + $0x78] sm:$0xff]
    %v1057 = vld [vmem:[%s3 + $0x80] sm:$0xff]
    %v1058 = vld [vmem:[%s3 + $0x88] sm:$0xff]
    %v1059 = vld [vmem:[%s3 + $0x90] sm:$0xff]
    %v1060 = vld [vmem:[%s3 + $0x98] sm:$0xff]
    %v1061 = vld [vmem:[%s3 + $0xa0] sm:$0xff]
    %v1062 = vld [vmem:[%s3 + $0xa8] sm:$0xff]
    %v1063 = vld [vmem:[%s3 + $0xb0] sm:$0xff]
    %v1064 = vld [vmem:[%s3 + $0xb8] sm:$0xff]
    %v1065 = vld [vmem:[%s3 + $0xc0] sm:$0xff]
    %v1066 = vld [vmem:[%s3 + $0xc8] sm:$0xff]
    %v1067 = vld [vmem:[%s3 + $0xd0] sm:$0xff]
    %v1068 = vld [vmem:[%s3 + $0xd8] sm:$0xff]
    %v1069 = vld [vmem:[%s3 + $0xe0] sm:$0xff]
    %v1070 = vld [vmem:[%s3 + $0xe8] sm:$0xff]
    %v1071 = vld [vmem:[%s3 + $0xf0] sm:$0xff]
    %v1072 = vld [vmem:[%s3 + $0xf8] sm:$0xff]
    %v1073 = vld [vmem:[%s3 + $0x100] sm:$0xff]
    %v1074 = vld [vmem:[%s3 + $0x108] sm:$0xff]
    %v1075 = vld [vmem:[%s3 + $0x110] sm:$0xff]
    %v1076 = vld [vmem:[%s3 + $0x118] sm:$0xff]
    %v1077 = vld [vmem:[%s3 + $0x120] sm:$0xff]
    %v1078 = vld [vmem:[%s3 + $0x128] sm:$0xff]
    %v1079 = vld [vmem:[%s3 + $0x130] sm:$0xff]
    %v1080 = vld [vmem:[%s3 + $0x138] sm:$0xff]
    %v1081 = vld [vmem:[%s3 + $0x140] sm:$0xff]
    %v1082 = vld [vmem:[%s3 + $0x148] sm:$0xff]
    %v1083 = vld [vmem:[%s3 + $0x150] sm:$0xff]
    %v1084 = vld [vmem:[%s3 + $0x158] sm:$0xff]
    %v1085 = vld [vmem:[%s3 + $0x160] sm:$0xff]
    %v1086 = vld [vmem:[%s3 + $0x168] sm:$0xff]
    %v1087 = vld [vmem:[%s3 + $0x170] sm:$0xff]
    %v1088 = vld [vmem:[%s3 + $0x178] sm:$0xff]
    %v1089 = vld [vmem:[%s4] sm:$0x1]
    %v1091 = vlaneseq
    %v1092 = vshrl.u32 %v1091, 7
    %v1093 = vsub.s32 0, %v1092
    %v1094 = vrot.slane %v1089, %v1093
    %1096 = vmatprep.subr.mxu0 0.0
    %1097 = vmatpush1.msra.mxu0 %v1041
    %1098 = vmatprep.subr.mxu0 0.0
    %1099 = vmatpush1.msra.mxu0 %v1042
    %1100 = vmatprep.subr.mxu0 0.0
    %1101 = vmatpush1.msra.mxu0 %v1043
    %1102 = vmatprep.subr.mxu0 0.0
    %1103 = vmatpush1.msra.mxu0 %v1044
    %1104 = vmatprep.subr.mxu0 0.0
    %1105 = vmatpush1.msra.mxu0 %v1045
    %1106 = vmatprep.subr.mxu0 0.0
    %1107 = vmatpush1.msra.mxu0 %v1046
    %1108 = vmatprep.subr.mxu0 0.0
    %1109 = vmatpush1.msra.mxu0 %v1047
    %1110 = vmatprep.subr.mxu0 0.0
    %1111 = vmatpush1.msra.mxu0 %v1048
    %1112 = vmatprep.subr.mxu0 0.0
    %1113 = vmatpush1.msra.mxu0 %v1049
    %1114 = vmatprep.subr.mxu0 0.0
    %1115 = vmatpush1.msra.mxu0 %v1050
    %1116 = vmatprep.subr.mxu0 0.0
    %1117 = vmatpush1.msra.mxu0 %v1051
    %1118 = vmatprep.subr.mxu0 0.0
    %1119 = vmatpush1.msra.mxu0 %v1052
    %1120 = vmatprep.subr.mxu0 0.0
    %1121 = vmatpush1.msra.mxu0 %v1053
    %1122 = vmatprep.subr.mxu0 0.0
    %1123 = vmatpush1.msra.mxu0 %v1054
    %1124 = vmatprep.subr.mxu0 0.0
    %1125 = vmatpush1.msra.mxu0 %v1055
    %1126 = vmatprep.subr.mxu0 0.0
    %1127 = vmatpush1.msra.mxu0 %v1056
    %1128 = vmatprep.subr.mxu0 0.0
    %1129 = vmatpush1.msra.mxu0 %v1057
    %1130 = vmatprep.subr.mxu0 0.0
    %1131 = vmatpush1.msra.mxu0 %v1058
    %1132 = vmatprep.subr.mxu0 0.0
    %1133 = vmatpush1.msra.mxu0 %v1059
    %1134 = vmatprep.subr.mxu0 0.0
    %1135 = vmatpush1.msra.mxu0 %v1060
    %1136 = vmatprep.subr.mxu0 0.0
    %1137 = vmatpush1.msra.mxu0 %v1061
    %1138 = vmatprep.subr.mxu0 0.0
    %1139 = vmatpush1.msra.mxu0 %v1062
    %1140 = vmatprep.subr.mxu0 0.0
    %1141 = vmatpush1.msra.mxu0 %v1063
    %1142 = vmatprep.subr.mxu0 0.0
    %1143 = vmatpush1.msra.mxu0 %v1064
    %1144 = vmatprep.subr.mxu0 0.0
    %1145 = vmatpush1.msra.mxu0 %v1065
    %1146 = vmatprep.subr.mxu0 0.0
    %1147 = vmatpush1.msra.mxu0 %v1066
    %1148 = vmatprep.subr.mxu0 0.0
    %1149 = vmatpush1.msra.mxu0 %v1067
    %1150 = vmatprep.subr.mxu0 0.0
    %1151 = vmatpush1.msra.mxu0 %v1068
    %1152 = vmatprep.subr.mxu0 0.0
    %1153 = vmatpush1.msra.mxu0 %v1069
    %1154 = vmatprep.subr.mxu0 0.0
    %1155 = vmatpush1.msra.mxu0 %v1070
    %1156 = vmatprep.subr.mxu0 0.0
    %1157 = vmatpush1.msra.mxu0 %v1071
    %1158 = vmatprep.subr.mxu0 0.0
    %1159 = vmatpush1.msra.mxu0 %v1072
    %1160 = vmatprep.mubr.f32.mxu0 %v1025
    %1161 = vmatmul.mubr.f32.gmra.mrb[0].mxu0 0.0
    %v1162 = vpop.f32.mrb[0].mxu0
    %v1163 = vadd.f32 %v1094, %v1162
    %v1164 = vpop.f32.mrb[0].mxu0
    %1165 = vmatprep.mubr.f32.mxu0 %v1026
    %1166 = vmatmul.mubr.f32.gmra.mrb[0].mxu0 %v1025
    %v1167 = vpop.f32.mrb[0].mxu0
    %v1168 = vadd.f32 %v1094, %v1167
    %v1169 = vpop.f32.mrb[0].mxu0
    %1170 = vmatprep.mubr.f32.mxu0 %v1027
    %1171 = vmatmul.mubr.f32.gmra.mrb[0].mxu0 %v1026
    %v1172 = vpop.f32.mrb[0].mxu0
    %v1173 = vadd.f32 %v1094, %v1172
    %v1174 = vpop.f32.mrb[0].mxu0
    %1175 = vmatprep.mubr.f32.mxu0 %v1028
    %1176 = vmatmul.mubr.f32.gmra.mrb[0].mxu0 %v1027
    %v1177 = vpop.f32.mrb[0].mxu0
    %v1178 = vadd.f32 %v1094, %v1177
    %v1179 = vpop.f32.mrb[0].mxu0
    %1180 = vmatprep.mubr.f32.mxu0 %v1029
    %1181 = vmatmul.mubr.f32.gmra.mrb[0].mxu0 %v1028
    %v1182 = vpop.f32.mrb[0].mxu0
    %v1183 = vadd.f32 %v1094, %v1182
    %v1184 = vpop.f32.mrb[0].mxu0
    %1185 = vmatprep.mubr.f32.mxu0 %v1030
    %1186 = vmatmul.mubr.f32.gmra.mrb[0].mxu0 %v1029
    %v1187 = vpop.f32.mrb[0].mxu0
    %v1188 = vadd.f32 %v1094, %v1187
    %v1189 = vpop.f32.mrb[0].mxu0
    %1190 = vmatprep.mubr.f32.mxu0 %v1031
    %1191 = vmatmul.mubr.f32.gmra.mrb[0].mxu0 %v1030
    %v1192 = vpop.f32.mrb[0].mxu0
    %v1193 = vadd.f32 %v1094, %v1192
    %v1194 = vpop.f32.mrb[0].mxu0
    %1195 = vmatprep.mubr.f32.mxu0 %v1032
    %1196 = vmatmul.mubr.f32.gmra.mrb[0].mxu0 %v1031
    %v1197 = vpop.f32.mrb[0].mxu0
    %v1198 = vadd.f32 %v1094, %v1197
    %v1199 = vpop.f32.mrb[0].mxu0
    %1200 = vmatprep.mubr.f32.mxu0 %v1033
    %1201 = vmatmul.mubr.f32.gmra.mrb[0].mxu0 %v1032
    %v1202 = vpop.f32.mrb[0].mxu0
    %v1203 = vadd.f32 %v1094, %v1202
    %v1204 = vpop.f32.mrb[0].mxu0
    %1205 = vmatprep.mubr.f32.mxu0 %v1034
    %1206 = vmatmul.mubr.f32.gmra.mrb[0].mxu0 %v1033
    %v1207 = vpop.f32.mrb[0].mxu0
    %v1208 = vadd.f32 %v1094, %v1207
    %v1209 = vpop.f32.mrb[0].mxu0
    %1210 = vmatprep.mubr.f32.mxu0 %v1035
    %1211 = vmatmul.mubr.f32.gmra.mrb[0].mxu0 %v1034
    %v1212 = vpop.f32.mrb[0].mxu0
    %v1213 = vadd.f32 %v1094, %v1212
    %v1214 = vpop.f32.mrb[0].mxu0
    %1215 = vmatprep.mubr.f32.mxu0 %v1036
    %1216 = vmatmul.mubr.f32.gmra.mrb[0].mxu0 %v1035
    %v1217 = vpop.f32.mrb[0].mxu0
    %v1218 = vadd.f32 %v1094, %v1217
    %v1219 = vpop.f32.mrb[0].mxu0
    %1220 = vmatprep.mubr.f32.mxu0 %v1037
    %1221 = vmatmul.mubr.f32.gmra.mrb[0].mxu0 %v1036
    %v1222 = vpop.f32.mrb[0].mxu0
    %v1223 = vadd.f32 %v1094, %v1222
    %v1224 = vpop.f32.mrb[0].mxu0
    %1225 = vmatprep.mubr.f32.mxu0 %v1038
    %1226 = vmatmul.mubr.f32.gmra.mrb[0].mxu0 %v1037
    %v1227 = vpop.f32.mrb[0].mxu0
    %v1228 = vadd.f32 %v1094, %v1227
    %v1229 = vpop.f32.mrb[0].mxu0
    %1230 = vmatprep.mubr.f32.mxu0 %v1039
    %1231 = vmatmul.mubr.f32.gmra.mrb[0].mxu0 %v1038
    %v1232 = vpop.f32.mrb[0].mxu0
    %v1233 = vadd.f32 %v1094, %v1232
    %v1234 = vpop.f32.mrb[0].mxu0
    %1235 = vmatprep.mubr.f32.mxu0 %v1040
    %1236 = vmatmul.mubr.f32.gmra.mrb[0].mxu0 %v1039
    %v1237 = vpop.f32.mrb[0].mxu0
    %v1238 = vadd.f32 %v1094, %v1237
    %v1239 = vpop.f32.mrb[0].mxu0
    %1240 = vdwg.mxu0
    %1241 = vmatprep.subr.mxu0 0.0
    %1242 = vmatpush1.msra.mxu0 %v1073
    %1243 = vmatprep.subr.mxu0 0.0
    %1244 = vmatpush1.msra.mxu0 %v1074
    %1245 = vmatprep.subr.mxu0 0.0
    %1246 = vmatpush1.msra.mxu0 %v1075
    %1247 = vmatprep.subr.mxu0 0.0
    %1248 = vmatpush1.msra.mxu0 %v1076
    %1249 = vmatprep.subr.mxu0 0.0
    %1250 = vmatpush1.msra.mxu0 %v1077
    %1251 = vmatprep.subr.mxu0 0.0
    %1252 = vmatpush1.msra.mxu0 %v1078
    %1253 = vmatprep.subr.mxu0 0.0
    %1254 = vmatpush1.msra.mxu0 %v1079
    %1255 = vmatprep.subr.mxu0 0.0
    %1256 = vmatpush1.msra.mxu0 %v1080
    %1257 = vmatprep.subr.mxu0 0.0
    %1258 = vmatpush1.msra.mxu0 %v1081
    %1259 = vmatprep.subr.mxu0 0.0
    %1260 = vmatpush1.msra.mxu0 %v1082
    %1261 = vmatprep.subr.mxu0 0.0
    %1262 = vmatpush1.msra.mxu0 %v1083
    %1263 = vmatprep.subr.mxu0 0.0
    %1264 = vmatpush1.msra.mxu0 %v1084
    %1265 = vmatprep.subr.mxu0 0.0
    %1266 = vmatpush1.msra.mxu0 %v1085
    %1267 = vmatprep.subr.mxu0 0.0
    %1268 = vmatpush1.msra.mxu0 %v1086
    %1269 = vmatprep.subr.mxu0 0.0
    %1270 = vmatpush1.msra.mxu0 %v1087
    %1271 = vmatprep.subr.mxu0 0.0
    %1272 = vmatpush1.msra.mxu0 %v1088
    %1273 = vmatprep.subr.mxu0 0.0
    %1274 = vmatpush1.msra.mxu0 0.0
    %1275 = vmatprep.subr.mxu0 0.0
    %1276 = vmatpush1.msra.mxu0 0.0
    %1277 = vmatprep.subr.mxu0 0.0
    %1278 = vmatpush1.msra.mxu0 0.0
    %1279 = vmatprep.subr.mxu0 0.0
    %1280 = vmatpush1.msra.mxu0 0.0
    %1281 = vmatprep.subr.mxu0 0.0
    %1282 = vmatpush1.msra.mxu0 0.0
    %1283 = vmatprep.subr.mxu0 0.0
    %1284 = vmatpush1.msra.mxu0 0.0
    %1285 = vmatprep.subr.mxu0 0.0
    %1286 = vmatpush1.msra.mxu0 0.0
    %1287 = vmatprep.subr.mxu0 0.0
    %1288 = vmatpush1.msra.mxu0 0.0
    %1289 = vmatprep.subr.mxu0 0.0
    %1290 = vmatpush1.msra.mxu0 0.0
    %1291 = vmatprep.subr.mxu0 0.0
    %1292 = vmatpush1.msra.mxu0 0.0
    %1293 = vmatprep.subr.mxu0 0.0
    %1294 = vmatpush1.msra.mxu0 0.0
    %1295 = vmatprep.subr.mxu0 0.0
    %1296 = vmatpush1.msra.mxu0 0.0
    %1297 = vmatprep.subr.mxu0 0.0
    %1298 = vmatpush1.msra.mxu0 0.0
    %1299 = vmatprep.subr.mxu0 0.0
    %1300 = vmatpush1.msra.mxu0 0.0
    %1301 = vmatprep.subr.mxu0 0.0
    %1302 = vmatpush1.msra.mxu0 0.0
    %1303 = vmatprep.subr.mxu0 0.0
    %1304 = vmatpush1.msra.mxu0 0.0
    %1305 = vmatprep.mubr.f32.mxu0 0.0
    %1306 = vmatmul.mubr.f32.gmra.mrb[0].mxu0 %v1026
    %v1307 = vpop.f32.mrb[0].mxu0
    %v1308 = vadd.f32 %v1163, %v1307
    %v1309 = vpop.f32.mrb[0].mxu0
    %1310 = vmatprep.mubr.f32.mxu0 0.0
    %1311 = vmatmul.mubr.f32.gmra.mrb[0].mxu0 %v1027
    %v1312 = vpop.f32.mrb[0].mxu0
    %v1313 = vadd.f32 %v1168, %v1312
    %v1314 = vpop.f32.mrb[0].mxu0
    %1315 = vmatprep.mubr.f32.mxu0 0.0
    %1316 = vmatmul.mubr.f32.gmra.mrb[0].mxu0 %v1028
    %v1317 = vpop.f32.mrb[0].mxu0
    %v1318 = vadd.f32 %v1173, %v1317
    %v1319 = vpop.f32.mrb[0].mxu0
    %1320 = vmatprep.mubr.f32.mxu0 0.0
    %1321 = vmatmul.mubr.f32.gmra.mrb[0].mxu0 %v1029
    %v1322 = vpop.f32.mrb[0].mxu0
    %v1323 = vadd.f32 %v1178, %v1322
    %v1324 = vpop.f32.mrb[0].mxu0
    %1325 = vmatprep.mubr.f32.mxu0 0.0
    %1326 = vmatmul.mubr.f32.gmra.mrb[0].mxu0 %v1030
    %v1327 = vpop.f32.mrb[0].mxu0
    %v1328 = vadd.f32 %v1183, %v1327
    %v1329 = vpop.f32.mrb[0].mxu0
    %1330 = vmatprep.mubr.f32.mxu0 0.0
    %1331 = vmatmul.mubr.f32.gmra.mrb[0].mxu0 %v1031
    %v1332 = vpop.f32.mrb[0].mxu0
    %v1333 = vadd.f32 %v1188, %v1332
    %v1334 = vpop.f32.mrb[0].mxu0
    %1335 = vmatprep.mubr.f32.mxu0 0.0
    %1336 = vmatmul.mubr.f32.gmra.mrb[0].mxu0 %v1032
    %v1337 = vpop.f32.mrb[0].mxu0
    %v1338 = vadd.f32 %v1193, %v1337
    %v1339 = vpop.f32.mrb[0].mxu0
    %1340 = vmatprep.mubr.f32.mxu0 0.0
    %1341 = vmatmul.mubr.f32.gmra.mrb[0].mxu0 %v1033
    %v1342 = vpop.f32.mrb[0].mxu0
    %v1343 = vadd.f32 %v1198, %v1342
    %v1344 = vpop.f32.mrb[0].mxu0
    %1345 = vmatprep.mubr.f32.mxu0 0.0
    %1346 = vmatmul.mubr.f32.gmra.mrb[0].mxu0 %v1034
    %v1347 = vpop.f32.mrb[0].mxu0
    %v1348 = vadd.f32 %v1203, %v1347
    %v1349 = vpop.f32.mrb[0].mxu0
    %1350 = vmatprep.mubr.f32.mxu0 0.0
    %1351 = vmatmul.mubr.f32.gmra.mrb[0].mxu0 %v1035
    %v1352 = vpop.f32.mrb[0].mxu0
    %v1353 = vadd.f32 %v1208, %v1352
    %v1354 = vpop.f32.mrb[0].mxu0
    %1355 = vmatprep.mubr.f32.mxu0 0.0
    %1356 = vmatmul.mubr.f32.gmra.mrb[0].mxu0 %v1036
    %v1357 = vpop.f32.mrb[0].mxu0
    %v1358 = vadd.f32 %v1213, %v1357
    %v1359 = vpop.f32.mrb[0].mxu0
    %1360 = vmatprep.mubr.f32.mxu0 0.0
    %1361 = vmatmul.mubr.f32.gmra.mrb[0].mxu0 %v1037
    %v1362 = vpop.f32.mrb[0].mxu0
    %v1363 = vadd.f32 %v1218, %v1362
    %v1364 = vpop.f32.mrb[0].mxu0
    %1365 = vmatprep.mubr.f32.mxu0 0.0
    %1366 = vmatmul.mubr.f32.gmra.mrb[0].mxu0 %v1038
    %v1367 = vpop.f32.mrb[0].mxu0
    %v1368 = vadd.f32 %v1223, %v1367
    %v1369 = vpop.f32.mrb[0].mxu0
    %1370 = vmatprep.mubr.f32.mxu0 0.0
    %1371 = vmatmul.mubr.f32.gmra.mrb[0].mxu0 %v1039
    %v1372 = vpop.f32.mrb[0].mxu0
    %v1373 = vadd.f32 %v1228, %v1372
    %v1374 = vpop.f32.mrb[0].mxu0
    %1375 = vmatprep.mubr.f32.mxu0 0.0
    %1376 = vmatmul.mubr.f32.gmra.mrb[0].mxu0 %v1040
    %v1377 = vpop.f32.mrb[0].mxu0
    %v1378 = vadd.f32 %v1233, %v1377
    %v1379 = vpop.f32.mrb[0].mxu0
    %1380 = vmatprep.mubr.f32.mxu0 0.0
    %1381 = vmatmul.mubr.f32.gmra.mrb[0].mxu0 0.0
    %v1382 = vpop.f32.mrb[0].mxu0
    %v1383 = vadd.f32 %v1238, %v1382
    %v1384 = vpop.f32.mrb[0].mxu0
    %1385 = vdwg.mxu0
    %v1386 = vmax.f32 %v1308, 0.0
    %v1387 = vmax.f32 %v1313, 0.0
    %v1388 = vmax.f32 %v1318, 0.0
    %v1389 = vmax.f32 %v1323, 0.0
    %v1390 = vmax.f32 %v1328, 0.0
    %v1391 = vmax.f32 %v1333, 0.0
    %v1392 = vmax.f32 %v1338, 0.0
    %v1393 = vmax.f32 %v1343, 0.0
    %v1394 = vmax.f32 %v1348, 0.0
    %v1395 = vmax.f32 %v1353, 0.0
    %v1396 = vmax.f32 %v1358, 0.0
    %v1397 = vmax.f32 %v1363, 0.0
    %v1398 = vmax.f32 %v1368, 0.0
    %v1399 = vmax.f32 %v1373, 0.0
    %v1400 = vmax.f32 %v1378, 0.0
    %v1401 = vmax.f32 %v1383, 0.0
    %v1402 = vmax.f32 %v1386, %v1387
    %v1403 = vmax.f32 %v1390, %v1391
    %v1404 = vmax.f32 %v1394, %v1395
    %v1405 = vmax.f32 %v1398, %v1399
    %v1406 = vmax.f32 %v1402, %v1388
    %v1407 = vmax.f32 %v1403, %v1392
    %v1408 = vmax.f32 %v1404, %v1396
    %v1409 = vmax.f32 %v1405, %v1400
    %v1410 = vmax.f32 %v1406, %v1389
    %v1411 = vmax.f32 %v1407, %v1393
    %v1412 = vmax.f32 %v1408, %v1397
    %v1413 = vmax.f32 %v1409, %v1401
    %1414 = vrot.lane.b32.xlu0 %v1410, 120
    %v1415 = vpop.permute.xlu0 %1414
    %1416 = vrot.lane.b32.xlu0 %v1411, 120
    %v1417 = vpop.permute.xlu0 %1416
    %1418 = vrot.lane.b32.xlu0 %v1412, 120
    %v1419 = vpop.permute.xlu0 %1418
    %1420 = vrot.lane.b32.xlu0 %v1413, 120
    %v1421 = vpop.permute.xlu0 %1420
    %v1422 = vmax.f32 %v1410, %v1415
    %v1423 = vmax.f32 %v1411, %v1417
    %v1424 = vmax.f32 %v1412, %v1419
    %v1425 = vmax.f32 %v1413, %v1421
    %1426 = vrot.lane.b32.xlu0 %v1410, 112
    %v1427 = vpop.permute.xlu0 %1426
    %1428 = vrot.lane.b32.xlu0 %v1411, 112
    %v1429 = vpop.permute.xlu0 %1428
    %1430 = vrot.lane.b32.xlu0 %v1412, 112
    %v1431 = vpop.permute.xlu0 %1430
    %1432 = vrot.lane.b32.xlu0 %v1413, 112
    %v1433 = vpop.permute.xlu0 %1432
    %v1434 = vmax.f32 %v1422, %v1427
    %v1435 = vmax.f32 %v1423, %v1429
    %v1436 = vmax.f32 %v1424, %v1431
    %v1437 = vmax.f32 %v1425, %v1433
    %1438 = vrot.lane.b32.xlu0 %v1410, 104
    %v1439 = vpop.permute.xlu0 %1438
    %1440 = vrot.lane.b32.xlu0 %v1411, 104
    %v1441 = vpop.permute.xlu0 %1440
    %1442 = vrot.lane.b32.xlu0 %v1412, 104
    %v1443 = vpop.permute.xlu0 %1442
    %1444 = vrot.lane.b32.xlu0 %v1413, 104
    %v1445 = vpop.permute.xlu0 %1444
    %v1446 = vmax.f32 %v1434, %v1439
    %v1447 = vmax.f32 %v1435, %v1441
    %v1448 = vmax.f32 %v1436, %v1443
    %v1449 = vmax.f32 %v1437, %v1445
    %v1450 = vld [vmem:[%s5] sm:$0xff]
    %v1451 = vld [vmem:[%s5 + $0x8] sm:$0xff]
    %v1452 = vld [vmem:[%s5 + $0x10] sm:$0xff]
    %v1453 = vld [vmem:[%s5 + $0x18] sm:$0xff]
    %v1454 = vld [vmem:[%s5 + $0x20] sm:$0xff]
    %v1455 = vld [vmem:[%s5 + $0x28] sm:$0xff]
    %v1456 = vld [vmem:[%s5 + $0x30] sm:$0xff]
    %v1457 = vld [vmem:[%s5 + $0x38] sm:$0xff]
    %v1458 = vld [vmem:[%s5 + $0x40] sm:$0xff]
    %v1459 = vld [vmem:[%s5 + $0x48] sm:$0xff]
    %v1460 = vld [vmem:[%s5 + $0x50] sm:$0xff]
    %v1461 = vld [vmem:[%s5 + $0x58] sm:$0xff]
    %v1462 = vld [vmem:[%s5 + $0x60] sm:$0xff]
    %v1463 = vld [vmem:[%s5 + $0x68] sm:$0xff]
    %v1464 = vld [vmem:[%s5 + $0x70] sm:$0xff]
    %v1465 = vld [vmem:[%s5 + $0x78] sm:$0xff]
    %v1466 = vld [vmem:[%s5 + $0x80] sm:$0xff]
    %v1467 = vld [vmem:[%s5 + $0x88] sm:$0xff]
    %v1468 = vld [vmem:[%s5 + $0x90] sm:$0xff]
    %v1469 = vld [vmem:[%s5 + $0x98] sm:$0xff]
    %v1470 = vld [vmem:[%s5 + $0xa0] sm:$0xff]
    %v1471 = vld [vmem:[%s5 + $0xa8] sm:$0xff]
    %v1472 = vld [vmem:[%s5 + $0xb0] sm:$0xff]
    %v1473 = vld [vmem:[%s5 + $0xb8] sm:$0xff]
    %v1474 = vld [vmem:[%s5 + $0xc0] sm:$0xff]
    %v1475 = vld [vmem:[%s5 + $0xc8] sm:$0xff]
    %v1476 = vld [vmem:[%s5 + $0xd0] sm:$0xff]
    %v1477 = vld [vmem:[%s5 + $0xd8] sm:$0xff]
    %v1478 = vld [vmem:[%s5 + $0xe0] sm:$0xff]
    %v1479 = vld [vmem:[%s5 + $0xe8] sm:$0xff]
    %v1480 = vld [vmem:[%s5 + $0xf0] sm:$0xff]
    %v1481 = vld [vmem:[%s5 + $0xf8] sm:$0xff]
    %v1482 = vld [vmem:[%s5 + $0x100] sm:$0xff]
    %v1483 = vld [vmem:[%s5 + $0x108] sm:$0xff]
    %v1484 = vld [vmem:[%s5 + $0x110] sm:$0xff]
    %v1485 = vld [vmem:[%s5 + $0x118] sm:$0xff]
    %v1486 = vld [vmem:[%s5 + $0x120] sm:$0xff]
    %v1487 = vld [vmem:[%s5 + $0x128] sm:$0xff]
    %v1488 = vld [vmem:[%s5 + $0x130] sm:$0xff]
    %v1489 = vld [vmem:[%s5 + $0x138] sm:$0xff]
    %v1490 = vld [vmem:[%s5 + $0x140] sm:$0xff]
    %v1491 = vld [vmem:[%s5 + $0x148] sm:$0xff]
    %v1492 = vld [vmem:[%s5 + $0x150] sm:$0xff]
    %v1493 = vld [vmem:[%s5 + $0x158] sm:$0xff]
    %v1494 = vld [vmem:[%s5 + $0x160] sm:$0xff]
    %v1495 = vld [vmem:[%s5 + $0x168] sm:$0xff]
    %v1496 = vld [vmem:[%s5 + $0x170] sm:$0xff]
    %v1497 = vld [vmem:[%s5 + $0x178] sm:$0xff]
    %v1498 = vld [vmem:[%s6] sm:$0x1]
    %v1500 = vlaneseq
    %v1501 = vshrl.u32 %v1500, 7
    %v1502 = vsub.s32 0, %v1501
    %v1503 = vrot.slane %v1498, %v1502
    %1505 = vmatprep.subr.mxu0 0.0
    %1506 = vmatpush1.msra.mxu0 %v1450
    %1507 = vmatprep.subr.mxu0 0.0
    %1508 = vmatpush1.msra.mxu0 %v1451
    %1509 = vmatprep.subr.mxu0 0.0
    %1510 = vmatpush1.msra.mxu0 %v1452
    %1511 = vmatprep.subr.mxu0 0.0
    %1512 = vmatpush1.msra.mxu0 %v1453
    %1513 = vmatprep.subr.mxu0 0.0
    %1514 = vmatpush1.msra.mxu0 %v1454
    %1515 = vmatprep.subr.mxu0 0.0
    %1516 = vmatpush1.msra.mxu0 %v1455
    %1517 = vmatprep.subr.mxu0 0.0
    %1518 = vmatpush1.msra.mxu0 %v1456
    %1519 = vmatprep.subr.mxu0 0.0
    %1520 = vmatpush1.msra.mxu0 %v1457
    %1521 = vmatprep.subr.mxu0 0.0
    %1522 = vmatpush1.msra.mxu0 %v1458
    %1523 = vmatprep.subr.mxu0 0.0
    %1524 = vmatpush1.msra.mxu0 %v1459
    %1525 = vmatprep.subr.mxu0 0.0
    %1526 = vmatpush1.msra.mxu0 %v1460
    %1527 = vmatprep.subr.mxu0 0.0
    %1528 = vmatpush1.msra.mxu0 %v1461
    %1529 = vmatprep.subr.mxu0 0.0
    %1530 = vmatpush1.msra.mxu0 %v1462
    %1531 = vmatprep.subr.mxu0 0.0
    %1532 = vmatpush1.msra.mxu0 %v1463
    %1533 = vmatprep.subr.mxu0 0.0
    %1534 = vmatpush1.msra.mxu0 %v1464
    %1535 = vmatprep.subr.mxu0 0.0
    %1536 = vmatpush1.msra.mxu0 %v1465
    %1537 = vmatprep.subr.mxu0 0.0
    %1538 = vmatpush1.msra.mxu0 %v1466
    %1539 = vmatprep.subr.mxu0 0.0
    %1540 = vmatpush1.msra.mxu0 %v1467
    %1541 = vmatprep.subr.mxu0 0.0
    %1542 = vmatpush1.msra.mxu0 %v1468
    %1543 = vmatprep.subr.mxu0 0.0
    %1544 = vmatpush1.msra.mxu0 %v1469
    %1545 = vmatprep.subr.mxu0 0.0
    %1546 = vmatpush1.msra.mxu0 %v1470
    %1547 = vmatprep.subr.mxu0 0.0
    %1548 = vmatpush1.msra.mxu0 %v1471
    %1549 = vmatprep.subr.mxu0 0.0
    %1550 = vmatpush1.msra.mxu0 %v1472
    %1551 = vmatprep.subr.mxu0 0.0
    %1552 = vmatpush1.msra.mxu0 %v1473
    %1553 = vmatprep.subr.mxu0 0.0
    %1554 = vmatpush1.msra.mxu0 %v1474
    %1555 = vmatprep.subr.mxu0 0.0
    %1556 = vmatpush1.msra.mxu0 %v1475
    %1557 = vmatprep.subr.mxu0 0.0
    %1558 = vmatpush1.msra.mxu0 %v1476
    %1559 = vmatprep.subr.mxu0 0.0
    %1560 = vmatpush1.msra.mxu0 %v1477
    %1561 = vmatprep.subr.mxu0 0.0
    %1562 = vmatpush1.msra.mxu0 %v1478
    %1563 = vmatprep.subr.mxu0 0.0
    %1564 = vmatpush1.msra.mxu0 %v1479
    %1565 = vmatprep.subr.mxu0 0.0
    %1566 = vmatpush1.msra.mxu0 %v1480
    %1567 = vmatprep.subr.mxu0 0.0
    %1568 = vmatpush1.msra.mxu0 %v1481
    %1569 = vmatprep.mubr.f32.mxu0 %v1446
    %1570 = vmatmul.mubr.f32.gmra.mrb[0].mxu0 0.0
    %v1571 = vpop.f32.mrb[0].mxu0
    %v1572 = vadd.f32 %v1503, %v1571
    %v1573 = vpop.f32.mrb[0].mxu0
    %1574 = vmatprep.mubr.f32.mxu0 %v1447
    %1575 = vmatmul.mubr.f32.gmra.mrb[0].mxu0 %v1446
    %v1576 = vpop.f32.mrb[0].mxu0
    %v1577 = vadd.f32 %v1503, %v1576
    %v1578 = vpop.f32.mrb[0].mxu0
    %1579 = vmatprep.mubr.f32.mxu0 %v1448
    %1580 = vmatmul.mubr.f32.gmra.mrb[0].mxu0 %v1447
    %v1581 = vpop.f32.mrb[0].mxu0
    %v1582 = vadd.f32 %v1503, %v1581
    %v1583 = vpop.f32.mrb[0].mxu0
    %1584 = vmatprep.mubr.f32.mxu0 %v1449
    %1585 = vmatmul.mubr.f32.gmra.mrb[0].mxu0 %v1448
    %v1586 = vpop.f32.mrb[0].mxu0
    %v1587 = vadd.f32 %v1503, %v1586
    %v1588 = vpop.f32.mrb[0].mxu0
    %1589 = vdwg.mxu0
    %1590 = vmatprep.subr.mxu0 0.0
    %1591 = vmatpush1.msra.mxu0 %v1482
    %1592 = vmatprep.subr.mxu0 0.0
    %1593 = vmatpush1.msra.mxu0 %v1483
    %1594 = vmatprep.subr.mxu0 0.0
    %1595 = vmatpush1.msra.mxu0 %v1484
    %1596 = vmatprep.subr.mxu0 0.0
    %1597 = vmatpush1.msra.mxu0 %v1485
    %1598 = vmatprep.subr.mxu0 0.0
    %1599 = vmatpush1.msra.mxu0 %v1486
    %1600 = vmatprep.subr.mxu0 0.0
    %1601 = vmatpush1.msra.mxu0 %v1487
    %1602 = vmatprep.subr.mxu0 0.0
    %1603 = vmatpush1.msra.mxu0 %v1488
    %1604 = vmatprep.subr.mxu0 0.0
    %1605 = vmatpush1.msra.mxu0 %v1489
    %1606 = vmatprep.subr.mxu0 0.0
    %1607 = vmatpush1.msra.mxu0 %v1490
    %1608 = vmatprep.subr.mxu0 0.0
    %1609 = vmatpush1.msra.mxu0 %v1491
    %1610 = vmatprep.subr.mxu0 0.0
    %1611 = vmatpush1.msra.mxu0 %v1492
    %1612 = vmatprep.subr.mxu0 0.0
    %1613 = vmatpush1.msra.mxu0 %v1493
    %1614 = vmatprep.subr.mxu0 0.0
    %1615 = vmatpush1.msra.mxu0 %v1494
    %1616 = vmatprep.subr.mxu0 0.0
    %1617 = vmatpush1.msra.mxu0 %v1495
    %1618 = vmatprep.subr.mxu0 0.0
    %1619 = vmatpush1.msra.mxu0 %v1496
    %1620 = vmatprep.subr.mxu0 0.0
    %1621 = vmatpush1.msra.mxu0 %v1497
    %1622 = vmatprep.subr.mxu0 0.0
    %1623 = vmatpush1.msra.mxu0 0.0
    %1624 = vmatprep.subr.mxu0 0.0
    %1625 = vmatpush1.msra.mxu0 0.0
    %1626 = vmatprep.subr.mxu0 0.0
    %1627 = vmatpush1.msra.mxu0 0.0
    %1628 = vmatprep.subr.mxu0 0.0
    %1629 = vmatpush1.msra.mxu0 0.0
    %1630 = vmatprep.subr.mxu0 0.0
    %1631 = vmatpush1.msra.mxu0 0.0
    %1632 = vmatprep.subr.mxu0 0.0
    %1633 = vmatpush1.msra.mxu0 0.0
    %1634 = vmatprep.subr.mxu0 0.0
    %1635 = vmatpush1.msra.mxu0 0.0
    %1636 = vmatprep.subr.mxu0 0.0
    %1637 = vmatpush1.msra.mxu0 0.0
    %1638 = vmatprep.subr.mxu0 0.0
    %1639 = vmatpush1.msra.mxu0 0.0
    %1640 = vmatprep.subr.mxu0 0.0
    %1641 = vmatpush1.msra.mxu0 0.0
    %1642 = vmatprep.subr.mxu0 0.0
    %1643 = vmatpush1.msra.mxu0 0.0
    %1644 = vmatprep.subr.mxu0 0.0
    %1645 = vmatpush1.msra.mxu0 0.0
    %1646 = vmatprep.subr.mxu0 0.0
    %1647 = vmatpush1.msra.mxu0 0.0
    %1648 = vmatprep.subr.mxu0 0.0
    %1649 = vmatpush1.msra.mxu0 0.0
    %1650 = vmatprep.subr.mxu0 0.0
    %1651 = vmatpush1.msra.mxu0 0.0
    %1652 = vmatprep.subr.mxu0 0.0
    %1653 = vmatpush1.msra.mxu0 0.0
    %1654 = vmatprep.mubr.f32.mxu0 0.0
    %1655 = vmatmul.mubr.f32.gmra.mrb[0].mxu0 %v1447
    %v1656 = vpop.f32.mrb[0].mxu0
    %v1657 = vadd.f32 %v1572, %v1656
    %v1658 = vpop.f32.mrb[0].mxu0
    %1659 = vmatprep.mubr.f32.mxu0 0.0
    %1660 = vmatmul.mubr.f32.gmra.mrb[0].mxu0 %v1448
    %v1661 = vpop.f32.mrb[0].mxu0
    %v1662 = vadd.f32 %v1577, %v1661
    %v1663 = vpop.f32.mrb[0].mxu0
    %1664 = vmatprep.mubr.f32.mxu0 0.0
    %1665 = vmatmul.mubr.f32.gmra.mrb[0].mxu0 %v1449
    %v1666 = vpop.f32.mrb[0].mxu0
    %v1667 = vadd.f32 %v1582, %v1666
    %v1668 = vpop.f32.mrb[0].mxu0
    %1669 = vmatprep.mubr.f32.mxu0 0.0
    %1670 = vmatmul.mubr.f32.gmra.mrb[0].mxu0 0.0
    %v1671 = vpop.f32.mrb[0].mxu0
    %v1672 = vadd.f32 %v1587, %v1671
    %v1673 = vpop.f32.mrb[0].mxu0
    %1674 = vdwg.mxu0
    %v1675 = vmax.f32 %v1657, 0.0
    %v1676 = vmax.f32 %v1662, 0.0
    %v1677 = vmax.f32 %v1667, 0.0
    %v1678 = vmax.f32 %v1672, 0.0
    %v1679 = vmax.f32 %v1675, %v1676
    %v1680 = vmax.f32 %v1679, %v1677
    %v1681 = vmax.f32 %v1680, %v1678
    %1683 = vrot.lane.b32.xlu0 %v1681, 112
    %v1684 = vpop.permute.xlu0 %1683
    %v1686 = vmax.f32 %v1681, %v1684
    %1687 = vrot.lane.b32.xlu0 %v1681, 96
    %v1688 = vpop.permute.xlu0 %1687
    %v1690 = vmax.f32 %v1686, %v1688
    %1691 = vrot.lane.b32.xlu0 %v1681, 80
    %v1692 = vpop.permute.xlu0 %1691
    %v1694 = vmax.f32 %v1690, %v1692
    %v1695 = vld [vmem:[%s7] sm:$0xff]
    %v1696 = vld [vmem:[%s7 + $0x8] sm:$0xff]
    %v1697 = vld [vmem:[%s8] sm:$0x1]
    %v1699 = vlaneseq
    %v1700 = vshrl.u32 %v1699, 7
    %v1701 = vsub.s32 0, %v1700
    %v1702 = vrot.slane %v1697, %v1701
    %vm1704 = vcmask 130048
    %v1706 = vsel %vm1704, %v1694, 0
    %1708 = vmatprep.subr.mxu0 0.0
    %1709 = vmatpush1.msra.mxu0 %v1695
    %1710 = vmatprep.subr.mxu0 0.0
    %1711 = vmatpush1.msra.mxu0 %v1696
    %1712 = vmatprep.subr.mxu0 0.0
    %1713 = vmatpush1.msra.mxu0 0.0
    %1714 = vmatprep.subr.mxu0 0.0
    %1715 = vmatpush1.msra.mxu0 0.0
    %1716 = vmatprep.subr.mxu0 0.0
    %1717 = vmatpush1.msra.mxu0 0.0
    %1718 = vmatprep.subr.mxu0 0.0
    %1719 = vmatpush1.msra.mxu0 0.0
    %1720 = vmatprep.subr.mxu0 0.0
    %1721 = vmatpush1.msra.mxu0 0.0
    %1722 = vmatprep.subr.mxu0 0.0
    %1723 = vmatpush1.msra.mxu0 0.0
    %1724 = vmatprep.subr.mxu0 0.0
    %1725 = vmatpush1.msra.mxu0 0.0
    %1726 = vmatprep.subr.mxu0 0.0
    %1727 = vmatpush1.msra.mxu0 0.0
    %1728 = vmatprep.subr.mxu0 0.0
    %1729 = vmatpush1.msra.mxu0 0.0
    %1730 = vmatprep.subr.mxu0 0.0
    %1731 = vmatpush1.msra.mxu0 0.0
    %1732 = vmatprep.subr.mxu0 0.0
    %1733 = vmatpush1.msra.mxu0 0.0
    %1734 = vmatprep.subr.mxu0 0.0
    %1735 = vmatpush1.msra.mxu0 0.0
    %1736 = vmatprep.subr.mxu0 0.0
    %1737 = vmatpush1.msra.mxu0 0.0
    %1738 = vmatprep.subr.mxu0 0.0
    %1739 = vmatpush1.msra.mxu0 0.0
    %1740 = vmatprep.subr.mxu0 0.0
    %1741 = vmatpush1.msra.mxu0 0.0
    %1742 = vmatprep.subr.mxu0 0.0
    %1743 = vmatpush1.msra.mxu0 0.0
    %1744 = vmatprep.subr.mxu0 0.0
    %1745 = vmatpush1.msra.mxu0 0.0
    %1746 = vmatprep.subr.mxu0 0.0
    %1747 = vmatpush1.msra.mxu0 0.0
    %1748 = vmatprep.subr.mxu0 0.0
    %1749 = vmatpush1.msra.mxu0 0.0
    %1750 = vmatprep.subr.mxu0 0.0
    %1751 = vmatpush1.msra.mxu0 0.0
    %1752 = vmatprep.subr.mxu0 0.0
    %1753 = vmatpush1.msra.mxu0 0.0
    %1754 = vmatprep.subr.mxu0 0.0
    %1755 = vmatpush1.msra.mxu0 0.0
    %1756 = vmatprep.subr.mxu0 0.0
    %1757 = vmatpush1.msra.mxu0 0.0
    %1758 = vmatprep.subr.mxu0 0.0
    %1759 = vmatpush1.msra.mxu0 0.0
    %1760 = vmatprep.subr.mxu0 0.0
    %1761 = vmatpush1.msra.mxu0 0.0
    %1762 = vmatprep.subr.mxu0 0.0
    %1763 = vmatpush1.msra.mxu0 0.0
    %1764 = vmatprep.subr.mxu0 0.0
    %1765 = vmatpush1.msra.mxu0 0.0
    %1766 = vmatprep.subr.mxu0 0.0
    %1767 = vmatpush1.msra.mxu0 0.0
    %1768 = vmatprep.subr.mxu0 0.0
    %1769 = vmatpush1.msra.mxu0 0.0
    %1770 = vmatprep.subr.mxu0 0.0
    %1771 = vmatpush1.msra.mxu0 0.0
    %1772 = vmatprep.mubr.f32.mxu0 0.0
    %1773 = vmatmul.mubr.f32.gmra.mrb[0].mxu0 %v1706
    %v1774 = vpop.f32.mrb[0].mxu0
    %v1775 = vadd.f32 %v1702, %v1774
    %v1776 = vpop.f32.mrb[0].mxu0
    %1777 = vdwg.mxu0
    %v1778 = vmax.f32 %v1775, 0.0
    %v1779 = vld [vmem:[%s9] sm:$0xff]
    %v1780 = vld [vmem:[%s9 + $0x8] sm:$0xff]
    %v1781 = vld [vmem:[%s9 + $0x10] sm:$0xff]
    %v1782 = vld [vmem:[%s9 + $0x18] sm:$0xff]
    %v1783 = vld [vmem:[%s10] sm:$0x1]
    %v1785 = vlaneseq
    %v1786 = vshrl.u32 %v1785, 7
    %v1787 = vsub.s32 0, %v1786
    %v1788 = vrot.slane %v1783, %v1787
    %v1791 = vsel %vm94, %v1778, 0
    %1793 = vmatprep.subr.mxu0 0.0
    %1794 = vmatpush1.msra.mxu0 %v1779
    %1795 = vmatprep.subr.mxu0 0.0
    %1796 = vmatpush1.msra.mxu0 %v1780
    %1797 = vmatprep.subr.mxu0 0.0
    %1798 = vmatpush1.msra.mxu0 %v1781
    %1799 = vmatprep.subr.mxu0 0.0
    %1800 = vmatpush1.msra.mxu0 %v1782
    %1801 = vmatprep.subr.mxu0 0.0
    %1802 = vmatpush1.msra.mxu0 0.0
    %1803 = vmatprep.subr.mxu0 0.0
    %1804 = vmatpush1.msra.mxu0 0.0
    %1805 = vmatprep.subr.mxu0 0.0
    %1806 = vmatpush1.msra.mxu0 0.0
    %1807 = vmatprep.subr.mxu0 0.0
    %1808 = vmatpush1.msra.mxu0 0.0
    %1809 = vmatprep.subr.mxu0 0.0
    %1810 = vmatpush1.msra.mxu0 0.0
    %1811 = vmatprep.subr.mxu0 0.0
    %1812 = vmatpush1.msra.mxu0 0.0
    %1813 = vmatprep.subr.mxu0 0.0
    %1814 = vmatpush1.msra.mxu0 0.0
    %1815 = vmatprep.subr.mxu0 0.0
    %1816 = vmatpush1.msra.mxu0 0.0
    %1817 = vmatprep.subr.mxu0 0.0
    %1818 = vmatpush1.msra.mxu0 0.0
    %1819 = vmatprep.subr.mxu0 0.0
    %1820 = vmatpush1.msra.mxu0 0.0
    %1821 = vmatprep.subr.mxu0 0.0
    %1822 = vmatpush1.msra.mxu0 0.0
    %1823 = vmatprep.subr.mxu0 0.0
    %1824 = vmatpush1.msra.mxu0 0.0
    %1825 = vmatprep.subr.mxu0 0.0
    %1826 = vmatpush1.msra.mxu0 0.0
    %1827 = vmatprep.subr.mxu0 0.0
    %1828 = vmatpush1.msra.mxu0 0.0
    %1829 = vmatprep.subr.mxu0 0.0
    %1830 = vmatpush1.msra.mxu0 0.0
    %1831 = vmatprep.subr.mxu0 0.0
    %1832 = vmatpush1.msra.mxu0 0.0
    %1833 = vmatprep.subr.mxu0 0.0
    %1834 = vmatpush1.msra.mxu0 0.0
    %1835 = vmatprep.subr.mxu0 0.0
    %1836 = vmatpush1.msra.mxu0 0.0
    %1837 = vmatprep.subr.mxu0 0.0
    %1838 = vmatpush1.msra.mxu0 0.0
    %1839 = vmatprep.subr.mxu0 0.0
    %1840 = vmatpush1.msra.mxu0 0.0
    %1841 = vmatprep.subr.mxu0 0.0
    %1842 = vmatpush1.msra.mxu0 0.0
    %1843 = vmatprep.subr.mxu0 0.0
    %1844 = vmatpush1.msra.mxu0 0.0
    %1845 = vmatprep.subr.mxu0 0.0
    %1846 = vmatpush1.msra.mxu0 0.0
    %1847 = vmatprep.subr.mxu0 0.0
    %1848 = vmatpush1.msra.mxu0 0.0
    %1849 = vmatprep.subr.mxu0 0.0
    %1850 = vmatpush1.msra.mxu0 0.0
    %1851 = vmatprep.subr.mxu0 0.0
    %1852 = vmatpush1.msra.mxu0 0.0
    %1853 = vmatprep.subr.mxu0 0.0
    %1854 = vmatpush1.msra.mxu0 0.0
    %1855 = vmatprep.subr.mxu0 0.0
    %1856 = vmatpush1.msra.mxu0 0.0
    %1857 = vmatprep.mubr.f32.mxu0 0.0
    %1858 = vmatmul.mubr.f32.gmra.mrb[0].mxu0 %v1791
    %v1859 = vpop.f32.mrb[0].mxu0
    %v1860 = vadd.f32 %v1788, %v1859
    %v1861 = vpop.f32.mrb[0].mxu0
    %1862 = vdwg.mxu0
    %vm1863 = vcmask 64512
    %1864 = vst.msk [vmem:[#allocation5] sm:$0xff] %vm1863, %v1860
    // Predicated region
    $region50: #{tpu_custom_call.1} parent=1 // pred_check
      _
    $region51: #{tpu_custom_call.1} parent=1 // pred_check_branch
      %1866 = sbr.rel (0) target = $region53
    $region52: #{tpu_custom_call.1} parent=1 // pred_region
      %s1868 = ssub.s32 128, 128
      %1869 = vsyncadd [#allocation4], %s1868
      %s1871 = sshll.u32 [#allocation5], 4
      %s1872 = int_to_ptr.vmem [resolvable:$true] %s1871
      %1874 = dma.vmem_to_hbm [thread:$0]  %s1872, 128, %s11, [#allocation4]
    $region53: #{tpu_custom_call.1} parent=1 // pred_fallthru
      _
    // Predicated region
    $region54: #{tpu_custom_call.1} parent=1 // pred_check
      _
    $region55: #{tpu_custom_call.1} parent=1 // pred_check_branch
      %1876 = sbr.rel (0) target = $region57
    $region56: #{tpu_custom_call.1} parent=1 // pred_region
      %1877 = dma.done [#allocation4], 128
    $region57: #{tpu_custom_call.1} parent=1 // pred_fallthru
      _
    %1878 = vsyncpa [#allocation3], 1
    %1879 = vsyncpa [#allocation4], 1

</llo_original>
